<compile_context>
chip_gen: v7x
topology: tpu7x:2x2x1
jax: 0.10.0
libtpu: 0.0.40
codegen_flags: <defaults>
</compile_context>

<pallas_src>
import functools
import numpy as np
import jax
import jax.numpy as jnp
from jax import lax
from jax.experimental import pallas as pl
from jax.experimental.pallas import tpu as pltpu

BEGIN, INNER, OUT = 1, 2, 0
_NEG_INF = -1e30


def _round_up(x, m):
    return ((x + m - 1) // m) * m


# ---------------------------------------------------------------------------
# Pallas kernel: online-softmax over vocab tiles
# ---------------------------------------------------------------------------
def _make_kernel(v_valid: int, vt: int):
    def kernel(span_ref, w1t_ref, b1_ref, emb_ref, w2t_ref, b2_ref,
               score_ref, hid_ref,
               pseudo_sc, m_sc, l_sc, acc_sc):
        v_idx = pl.program_id(1)

        @pl.when(v_idx == 0)
        def _init():
            # pseudo = span @ W1^T + b1  (computed once per row tile, reused
            # across all vocab tiles)
            pseudo_sc[...] = (
                jnp.dot(span_ref[...], w1t_ref[...],
                        preferred_element_type=jnp.float32) + b1_ref[...])
            m_sc[...] = jnp.full_like(m_sc, -jnp.inf)
            l_sc[...] = jnp.zeros_like(l_sc)
            acc_sc[...] = jnp.zeros_like(acc_sc)

        emb_tile = emb_ref[...]                                   # (DEp, Vt) bf16
        pseudo_bf = pseudo_sc[...].astype(jnp.bfloat16)

        # score tile: (Mt, Vt), f32 accumulation on the MXU
        score = jnp.dot(pseudo_bf, emb_tile,
                        preferred_element_type=jnp.float32)
        score_ref[...] = score

        # mask padded vocab columns before softmax stats
        col = v_idx * vt + lax.broadcasted_iota(jnp.int32, score.shape, 1)
        score_m = jnp.where(col < v_valid, score, _NEG_INF)

        # online softmax update
        m_prev = m_sc[...]
        m_new = jnp.maximum(m_prev, jnp.max(score_m, axis=1, keepdims=True))
        corr = jnp.exp(m_prev - m_new)
        p = jnp.exp(score_m - m_new)                              # (Mt, Vt) f32
        l_sc[...] = corr * l_sc[...] + jnp.sum(p, axis=1, keepdims=True)
        # acc += p @ E_tile^T  (contract the Vt dims; no materialized transpose)
        acc_upd = lax.dot_general(
            p.astype(jnp.bfloat16), emb_tile,
            dimension_numbers=(((1,), (1,)), ((), ())),
            preferred_element_type=jnp.float32)                   # (Mt, DEp)
        acc_sc[...] = corr * acc_sc[...] + acc_upd
        m_sc[...] = m_new

        @pl.when(v_idx == pl.num_programs(1) - 1)
        def _finalize():
            # picked = softmax(score) @ E^T  ;  hidden = picked @ W2^T + b2
            picked = acc_sc[...] * pl.reciprocal(l_sc[...], approx=True)
            hid = jnp.dot(picked.astype(jnp.bfloat16), w2t_ref[...],
                          preferred_element_type=jnp.float32) + b2_ref[...]
            hid_ref[...] = hid.astype(hid_ref.dtype)

    return kernel


@functools.lru_cache(maxsize=None)
def _build_entity_call(Mp, Mt, D2p, DEp, DHp, V, Vp, Vt):
    grid = (Mp // Mt, Vp // Vt)
    kernel = _make_kernel(V, Vt)

    grid_spec = pltpu.PrefetchScalarGridSpec(
        num_scalar_prefetch=0,
        grid=grid,
        in_specs=[
            pl.BlockSpec((Mt, D2p), lambda i, v: (i, 0)),    # mention span
            pl.BlockSpec((D2p, DEp), lambda i, v: (0, 0)),   # W1^T (resident)
            pl.BlockSpec((1, DEp), lambda i, v: (0, 0)),     # b1
            pl.BlockSpec((DEp, Vt), lambda i, v: (0, v)),    # emb tile (streamed)
            pl.BlockSpec((DEp, DHp), lambda i, v: (0, 0)),   # W2^T (resident)
            pl.BlockSpec((1, DHp), lambda i, v: (0, 0)),     # b2
        ],
        out_specs=(
            pl.BlockSpec((Mt, Vt), lambda i, v: (i, v)),     # score
            pl.BlockSpec((Mt, DHp), lambda i, v: (i, 0)),    # hidden (final step)
        ),
        scratch_shapes=[
            pltpu.VMEM((Mt, DEp), jnp.float32),   # pseudo entity embedding
            pltpu.VMEM((Mt, 1), jnp.float32),     # running max m
            pltpu.VMEM((Mt, 1), jnp.float32),     # running sum  l
            pltpu.VMEM((Mt, DEp), jnp.float32),   # picked-entity accumulator
        ],
    )

    # advisory cost estimate for the XLA scheduler
    flops = 2 * Mp * (D2p * DEp + 2 * DEp * Vp + DEp * DHp)
    transcendentals = Mp * Vp
    bytes_accessed = (2 * (Mp * D2p + D2p * DEp + DEp * Vp + DEp * DHp)   # bf16 in
                      + 4 * (Mp * Vp + Mp * DHp + DEp + DHp))             # f32 out + biases

    # VMEM budget: double-buffered streamed tiles + resident weights + scratch
    tile_bytes = (2 * (Mt * D2p * 2 + DEp * Vt * 2 + Mt * Vt * 4 + Mt * DHp * 4)
                  + (D2p * DEp + DEp * DHp) * 2 + (DEp + DHp) * 4
                  + (2 * Mt * DEp + 2 * Mt) * 4)
    vmem_limit = int(min(max(2 * tile_bytes, 32 * 1024 * 1024),
                         56 * 1024 * 1024))   # stay under v7x's 64 MiB

    call = pl.pallas_call(
        kernel,
        out_shape=(jax.ShapeDtypeStruct((Mp, Vp), jnp.float32),
                   jax.ShapeDtypeStruct((Mp, DHp), jnp.float32)),
        grid_spec=grid_spec,
        compiler_params=pltpu.CompilerParams(
            dimension_semantics=("parallel", "arbitrary"),
            vmem_limit_bytes=vmem_limit),
        cost_estimate=pl.CostEstimate(flops=flops,
                                      transcendentals=transcendentals,
                                      bytes_accessed=bytes_accessed),
    )
    return jax.jit(call)


# ---------------------------------------------------------------------------
# Host-side glue: mention extraction (matches _get_last_mention semantics)
# ---------------------------------------------------------------------------
def _find_mentions(bio_np):
    begin_positions = np.argwhere(bio_np == BEGIN)          # (M, 2) = [batch, pos]
    ends = []
    for b, start in begin_positions:
        end = start
        for end in range(start + 1, bio_np.shape[1]):
            if bio_np[b, end] != INNER:
                break
        else:
            end = bio_np.shape[1]                            # ran off the end
        end -= 1
        end = max(end, start)
        ends.append(end)
    return begin_positions, np.asarray(ends, dtype=np.int32)


def entity_memory_forward(X, bio_output, params,
                          mention_to_add_entity_embedding="first"):
    """Returns (score, positions, weighted_entity_embedding)."""
    bio_np = np.asarray(jax.device_get(bio_output))
    begin_positions, end_positions = _find_mentions(bio_np)
    weighted = jnp.zeros_like(X)
    if len(begin_positions) == 0:
        return None, None, weighted

    M = begin_positions.shape[0]
    pos0_np = begin_positions[:, 0].astype(np.int32)
    pos1_np = begin_positions[:, 1].astype(np.int32)
    pos2_np = end_positions.astype(np.int32)
    pos0 = jnp.asarray(pos0_np)
    pos1 = jnp.asarray(pos1_np)
    pos2 = jnp.asarray(pos2_np)
    positions = jnp.stack([pos0, pos1, pos2], axis=0)        # (3, M)

    d_emb = X.shape[-1]
    w1, b1, emb, w2, b2 = (params["w1"], params["b1"], params["emb"],
                           params["w2"], params["b2"])
    d_ent, V = emb.shape

    first = X[pos0, pos1]                                    # (M, D)
    second = X[pos0, pos2]                                   # (M, D)
    mention_span = jnp.concatenate([first, second], axis=1)  # (M, 2D)

    # --- lane-dense, MXU-friendly padding / tile sizing ---
    Mt = 128
    Mp = _round_up(max(M, Mt), Mt)          # bucketed: recompile per 128-row bucket
    D2p = _round_up(2 * d_emb, 128)
    DEp = _round_up(d_ent, 128)
    DHp = _round_up(d_emb, 128)
    Vt = 512 if V >= 512 else _round_up(V, 128)
    Vp = _round_up(V, Vt)

    def pad2(a, r, c, dtype):
        out = jnp.zeros((r, c), dtype)
        return out.at[:a.shape[0], :a.shape[1]].set(a.astype(dtype))

    span_p = pad2(mention_span, Mp, D2p, jnp.bfloat16)
    w1t_p = pad2(w1.T, D2p, DEp, jnp.bfloat16)        # pre-transposed W1^T
    b1_p = pad2(b1.reshape(1, -1), 1, DEp, jnp.float32)
    emb_p = pad2(emb, DEp, Vp, jnp.bfloat16)
    w2t_p = pad2(w2.T, DEp, DHp, jnp.bfloat16)        # pre-transposed W2^T
    b2_p = pad2(b2.reshape(1, -1), 1, DHp, jnp.float32)

    call = _build_entity_call(Mp, Mt, D2p, DEp, DHp, V, Vp, Vt)
    score_p, hid_p = call(span_p, w1t_p, b1_p, emb_p, w2t_p, b2_p)

    score = score_p[:M, :V]
    hidden = hid_p[:M, :d_emb].astype(X.dtype)

    if mention_to_add_entity_embedding == "first":
        weighted = weighted.at[pos0, pos1].set(hidden)
    elif mention_to_add_entity_embedding == "last":
        weighted = weighted.at[pos0, pos2].set(hidden)
    elif mention_to_add_entity_embedding == "first-last":
        weighted = weighted.at[pos0, pos1].set(hidden)
        weighted = weighted.at[pos0, pos2].set(hidden)
    elif mention_to_add_entity_embedding == "all":
        mention_lens_np = pos2_np - pos1_np + 1
        max_len = int(mention_lens_np.max())      # host-side, no device round-trip
        mention_lens = jnp.asarray(mention_lens_np)
        for off in range(max_len):
            tgt = jnp.where(mention_lens > off, pos1 + off, pos1)
            weighted = weighted.at[pos0, tgt].set(hidden)

    return score, positions, weighted


# ---------------------------------------------------------------------------
# Deterministic parameter init (shapes from EntityMemory.__init__)
# ---------------------------------------------------------------------------
def init_params(key, encoder_embed_dim, entity_vocab_size, entity_embed_dim):
    k1, k2, k3, k4, k5 = jax.random.split(key, 5)
    scale = 0.02
    return {
        # hidden_to_entity: Linear(2*d_emb -> d_ent)
        "w1": scale * jax.random.normal(k1, (entity_embed_dim, 2 * encoder_embed_dim), jnp.float32),
        "b1": scale * jax.random.normal(k2, (entity_embed_dim,), jnp.float32),
        # entity_embedding: Linear(V -> d_ent, bias=False) -> weight (d_ent, V)
        "emb": scale * jax.random.normal(k3, (entity_embed_dim, entity_vocab_size), jnp.float32),
        # entity_to_hidden: Linear(d_ent -> d_emb)
        "w2": scale * jax.random.normal(k4, (encoder_embed_dim, entity_embed_dim), jnp.float32),
        "b2": scale * jax.random.normal(k5, (encoder_embed_dim,), jnp.float32),
    }


def _reference(X, pos0, pos1, pos2, params):
    """Pure-JAX f32 reference of the supervised path (for a sanity check)."""
    span = jnp.concatenate([X[pos0, pos1], X[pos0, pos2]], axis=1)
    pseudo = span @ params["w1"].T + params["b1"]
    score = pseudo @ params["emb"]
    alpha = jax.nn.softmax(score, axis=1)
    picked = alpha @ params["emb"].T
    hidden = picked @ params["w2"].T + params["b2"]
    return score, hidden


if __name__ == "__main__":
    B, N = 2, 16          # batch, sequence length
    d_emb = 32            # encoder_embed_dim
    d_ent = 16            # entity_embed_dim
    V = 64                # entity_vocab_size

    key = jax.random.PRNGKey(0)
    kx, kp = jax.random.split(key)
    X = jax.random.normal(kx, (B, N, d_emb), jnp.float32)

    # deterministic BIO tags: 0=out, 1=begin, 2=inner
    bio = np.zeros((B, N), dtype=np.int32)
    bio[0, 2] = BEGIN; bio[0, 3] = INNER; bio[0, 4] = INNER     # mention [2..4]
    bio[0, 10] = BEGIN                                          # mention [10..10]
    bio[1, 5] = BEGIN; bio[1, 6] = INNER                        # mention [5..6]
    bio = jnp.asarray(bio)

    params = init_params(kp, d_emb, V, d_ent)

    score, positions, weighted = entity_memory_forward(
        X, bio, params, mention_to_add_entity_embedding="first")
    jax.block_until_ready(weighted)
    jax.block_until_ready(score)

    assert score.shape == (3, V)
    assert positions.shape == (3, 3)
    assert weighted.shape == (B, N, d_emb)

    # sanity check against a pure-JAX f32 reference (loose tolerance: bf16 MXU
    # inputs + approx reciprocal inside the kernel)
    ref_score, ref_hidden = _reference(X, positions[0], positions[1],
                                       positions[2], params)
    np.testing.assert_allclose(np.asarray(score), np.asarray(ref_score),
                               rtol=0.1, atol=0.02)
    np.testing.assert_allclose(np.asarray(weighted[positions[0], positions[1]]),
                               np.asarray(ref_hidden), rtol=0.1, atol=0.02)

    print("KERNEL_OK")
</pallas_src>

<mosaic_0001>
module attributes {stable_mosaic.version = 11 : i64} {
  func.func @kernel(%arg0: i32, %arg1: i32, %arg2: memref<128x128xbf16, #tpu.memory_space<vmem>>, %arg3: memref<128x128xbf16, #tpu.memory_space<vmem>>, %arg4: memref<1x128xf32, #tpu.memory_space<vmem>>, %arg5: memref<128x128xbf16, #tpu.memory_space<vmem>>, %arg6: memref<128x128xbf16, #tpu.memory_space<vmem>>, %arg7: memref<1x128xf32, #tpu.memory_space<vmem>>, %arg8: memref<128x128xf32, #tpu.memory_space<vmem>>, %arg9: memref<128x128xf32, #tpu.memory_space<vmem>>, %arg10: memref<128x128xf32, #tpu.memory_space<vmem>>, %arg11: memref<128x1xf32, #tpu.memory_space<vmem>>, %arg12: memref<128x1xf32, #tpu.memory_space<vmem>>, %arg13: memref<128x128xf32, #tpu.memory_space<vmem>>) attributes {dimension_semantics = [#tpu.dimension_semantics<parallel>, #tpu.dimension_semantics<arbitrary>], iteration_bounds = array<i64: 1, 1>, scalar_prefetch = 0 : i64, scratch_operands = 4 : i64, tpu.core_type = #tpu.core_type<tc>, window_params = [{transform_indices = @transform_0, window_bounds = array<i64: 128, 128>}, {pipeline_mode = #tpu.pipeline_mode<synchronous>, transform_indices = @transform_1, window_bounds = array<i64: 128, 128>}, {pipeline_mode = #tpu.pipeline_mode<synchronous>, transform_indices = @transform_2, window_bounds = array<i64: 1, 128>}, {transform_indices = @transform_3, window_bounds = array<i64: 128, 128>}, {pipeline_mode = #tpu.pipeline_mode<synchronous>, transform_indices = @transform_4, window_bounds = array<i64: 128, 128>}, {pipeline_mode = #tpu.pipeline_mode<synchronous>, transform_indices = @transform_5, window_bounds = array<i64: 1, 128>}, {transform_indices = @transform_6, window_bounds = array<i64: 128, 128>}, {transform_indices = @transform_7, window_bounds = array<i64: 128, 128>}]} {
    %c0_i32 = arith.constant 0 : i32
    %0 = arith.cmpi eq, %arg1, %c0_i32 : i32
    %1 = arith.extui %0 : i1 to i32
    %c0_i32_0 = arith.constant 0 : i32
    %2 = arith.cmpi ne, %1, %c0_i32_0 : i32
    scf.if %2 {
      %c0_24 = arith.constant 0 : index
      %c0_25 = arith.constant 0 : index
      %42 = vector.load %arg2[%c0_24, %c0_25] : memref<128x128xbf16, #tpu.memory_space<vmem>>, vector<128x128xbf16>
      %c0_26 = arith.constant 0 : index
      %c0_27 = arith.constant 0 : index
      %43 = vector.load %arg3[%c0_26, %c0_27] : memref<128x128xbf16, #tpu.memory_space<vmem>>, vector<128x128xbf16>
      %cst_28 = arith.constant dense<0.000000e+00> : vector<128x128xf32>
      %44 = tpu.matmul %42, %43, %cst_28 {dimension_numbers = #tpu.dot_dimension_numbers<[1], [0], [0], [1], [0, 0, 1, 1], [], []>} : vector<128x128xbf16>, vector<128x128xbf16>, vector<128x128xf32> -> vector<128x128xf32>
      %c0_29 = arith.constant 0 : index
      %c0_30 = arith.constant 0 : index
      %45 = vector.load %arg4[%c0_29, %c0_30] : memref<1x128xf32, #tpu.memory_space<vmem>>, vector<1x128xf32>
      %46 = vector.broadcast %45 : vector<1x128xf32> to vector<128x128xf32>
      %47 = arith.addf %44, %46 : vector<128x128xf32>
      %c0_31 = arith.constant 0 : index
      %c0_32 = arith.constant 0 : index
      %48 = vector.load %arg10[%c0_31, %c0_32] : memref<128x128xf32, #tpu.memory_space<vmem>>, vector<128x128xf32>
      tpu.vector_store %arg10[%c0_31, %c0_32], %47 {strides = array<i32>} : memref<128x128xf32, #tpu.memory_space<vmem>>, vector<128x128xf32>,
      %cst_33 = arith.constant 0xFF800000 : f32
      %49 = vector.broadcast %cst_33 : f32 to vector<128x1xf32>
      %c0_34 = arith.constant 0 : index
      %c0_35 = arith.constant 0 : index
      %50 = vector.load %arg11[%c0_34, %c0_35] : memref<128x1xf32, #tpu.memory_space<vmem>>, vector<128x1xf32>
      tpu.vector_store %arg11[%c0_34, %c0_35], %49 {strides = array<i32>} : memref<128x1xf32, #tpu.memory_space<vmem>>, vector<128x1xf32>,
      %cst_36 = arith.constant 0.000000e+00 : f32
      %51 = vector.broadcast %cst_36 : f32 to vector<128x1xf32>
      %c0_37 = arith.constant 0 : index
      %c0_38 = arith.constant 0 : index
      %52 = vector.load %arg12[%c0_37, %c0_38] : memref<128x1xf32, #tpu.memory_space<vmem>>, vector<128x1xf32>
      tpu.vector_store %arg12[%c0_37, %c0_38], %51 {strides = array<i32>} : memref<128x1xf32, #tpu.memory_space<vmem>>, vector<128x1xf32>,
      %cst_39 = arith.constant 0.000000e+00 : f32
      %53 = vector.broadcast %cst_39 : f32 to vector<128x128xf32>
      %c0_40 = arith.constant 0 : index
      %c0_41 = arith.constant 0 : index
      %54 = vector.load %arg13[%c0_40, %c0_41] : memref<128x128xf32, #tpu.memory_space<vmem>>, vector<128x128xf32>
      tpu.vector_store %arg13[%c0_40, %c0_41], %53 {strides = array<i32>} : memref<128x128xf32, #tpu.memory_space<vmem>>, vector<128x128xf32>,
    } else {
    }
    %c0 = arith.constant 0 : index
    %c0_1 = arith.constant 0 : index
    %3 = vector.load %arg5[%c0, %c0_1] : memref<128x128xbf16, #tpu.memory_space<vmem>>, vector<128x128xbf16>
    %c0_2 = arith.constant 0 : index
    %c0_3 = arith.constant 0 : index
    %4 = vector.load %arg10[%c0_2, %c0_3] : memref<128x128xf32, #tpu.memory_space<vmem>>, vector<128x128xf32>
    %5 = arith.truncf %4 : vector<128x128xf32> to vector<128x128xbf16>
    %cst = arith.constant dense<0.000000e+00> : vector<128x128xf32>
    %6 = tpu.matmul %5, %3, %cst {dimension_numbers = #tpu.dot_dimension_numbers<[1], [0], [0], [1], [0, 0, 1, 1], [], []>} : vector<128x128xbf16>, vector<128x128xbf16>, vector<128x128xf32> -> vector<128x128xf32>
    %c0_4 = arith.constant 0 : index
    %c0_5 = arith.constant 0 : index
    %7 = vector.load %arg8[%c0_4, %c0_5] : memref<128x128xf32, #tpu.memory_space<vmem>>, vector<128x128xf32>
    tpu.vector_store %arg8[%c0_4, %c0_5], %6 {strides = array<i32>} : memref<128x128xf32, #tpu.memory_space<vmem>>, vector<128x128xf32>,
    %c128_i32 = arith.constant 128 : i32
    %8 = arith.muli %arg1, %c128_i32 : i32
    %9 = tpu.iota {dimensions = array<i32: 1>} : vector<128x128xi32>
    %10 = vector.broadcast %8 : i32 to vector<128x128xi32>
    %11 = arith.addi %10, %9 : vector<128x128xi32>
    %c64_i32 = arith.constant 64 : i32
    %12 = vector.broadcast %c64_i32 : i32 to vector<128x128xi32>
    %13 = arith.cmpi slt, %11, %12 : vector<128x128xi32>
    %cst_6 = arith.constant -1.000000e+30 : f32
    %14 = vector.broadcast %cst_6 : f32 to vector<128x128xf32>
    %15 = arith.select %13, %6, %14 : vector<128x128xi1>, vector<128x128xf32>
    %c0_7 = arith.constant 0 : index
    %c0_8 = arith.constant 0 : index
    %16 = vector.load %arg11[%c0_7, %c0_8] : memref<128x1xf32, #tpu.memory_space<vmem>>, vector<128x1xf32>
    %cst_9 = arith.constant dense<0xFF800000> : vector<128xf32>
    %17 = vector.multi_reduction <maximumf>, %15, %cst_9 [1] : vector<128x128xf32> to vector<128xf32>
    %18 = vector.shape_cast %17 : vector<128xf32> to vector<128x1xf32>
    %19 = arith.maximumf %16, %18 : vector<128x1xf32>
    %20 = arith.subf %16, %19 : vector<128x1xf32>
    %21 = math.exp %20 : vector<128x1xf32>
    %22 = vector.broadcast %19 : vector<128x1xf32> to vector<128x128xf32>
    %23 = arith.subf %15, %22 : vector<128x128xf32>
    %24 = math.exp %23 : vector<128x128xf32>
    %c0_10 = arith.constant 0 : index
    %c0_11 = arith.constant 0 : index
    %25 = vector.load %arg12[%c0_10, %c0_11] : memref<128x1xf32, #tpu.memory_space<vmem>>, vector<128x1xf32>
    %26 = arith.mulf %21, %25 : vector<128x1xf32>
    %cst_12 = arith.constant dense<0.000000e+00> : vector<128xf32>
    %27 = vector.multi_reduction <add>, %24, %cst_12 [1] : vector<128x128xf32> to vector<128xf32>
    %28 = vector.shape_cast %27 : vector<128xf32> to vector<128x1xf32>
    %29 = arith.addf %26, %28 : vector<128x1xf32>
    %c0_13 = arith.constant 0 : index
    %c0_14 = arith.constant 0 : index
    %30 = vector.load %arg12[%c0_13, %c0_14] : memref<128x1xf32, #tpu.memory_space<vmem>>, vector<128x1xf32>
    tpu.vector_store %arg12[%c0_13, %c0_14], %29 {strides = array<i32>} : memref<128x1xf32, #tpu.memory_space<vmem>>, vector<128x1xf32>,
    %31 = arith.truncf %24 : vector<128x128xf32> to vector<128x128xbf16>
    %cst_15 = arith.constant dense<0.000000e+00> : vector<128x128xf32>
    %32 = tpu.matmul %31, %3, %cst_15 {dimension_numbers = #tpu.dot_dimension_numbers<[1], [1], [0], [0], [0, 0, 1, 0], [], []>} : vector<128x128xbf16>, vector<128x128xbf16>, vector<128x128xf32> -> vector<128x128xf32>
    %c0_16 = arith.constant 0 : index
    %c0_17 = arith.constant 0 : index
    %33 = vector.load %arg13[%c0_16, %c0_17] : memref<128x128xf32, #tpu.memory_space<vmem>>, vector<128x128xf32>
    %34 = vector.broadcast %21 : vector<128x1xf32> to vector<128x128xf32>
    %35 = arith.mulf %34, %33 : vector<128x128xf32>
    %36 = arith.addf %35, %32 : vector<128x128xf32>
    %c0_18 = arith.constant 0 : index
    %c0_19 = arith.constant 0 : index
    %37 = vector.load %arg13[%c0_18, %c0_19] : memref<128x128xf32, #tpu.memory_space<vmem>>, vector<128x128xf32>
    tpu.vector_store %arg13[%c0_18, %c0_19], %36 {strides = array<i32>} : memref<128x128xf32, #tpu.memory_space<vmem>>, vector<128x128xf32>,
    %c0_20 = arith.constant 0 : index
    %c0_21 = arith.constant 0 : index
    %38 = vector.load %arg11[%c0_20, %c0_21] : memref<128x1xf32, #tpu.memory_space<vmem>>, vector<128x1xf32>
    tpu.vector_store %arg11[%c0_20, %c0_21], %19 {strides = array<i32>} : memref<128x1xf32, #tpu.memory_space<vmem>>, vector<128x1xf32>,
    %c0_i32_22 = arith.constant 0 : i32
    %39 = arith.cmpi eq, %arg1, %c0_i32_22 : i32
    %40 = arith.extui %39 : i1 to i32
    %c0_i32_23 = arith.constant 0 : i32
    %41 = arith.cmpi ne, %40, %c0_i32_23 : i32
    scf.if %41 {
      %c0_24 = arith.constant 0 : index
      %c0_25 = arith.constant 0 : index
      %42 = vector.load %arg13[%c0_24, %c0_25] : memref<128x128xf32, #tpu.memory_space<vmem>>, vector<128x128xf32>
      %c0_26 = arith.constant 0 : index
      %c0_27 = arith.constant 0 : index
      %43 = vector.load %arg12[%c0_26, %c0_27] : memref<128x1xf32, #tpu.memory_space<vmem>>, vector<128x1xf32>
      %44 = tpu.reciprocal %43 {approx = true} : vector<128x1xf32> -> vector<128x1xf32>
      %45 = vector.broadcast %44 : vector<128x1xf32> to vector<128x128xf32>
      %46 = arith.mulf %42, %45 : vector<128x128xf32>
      %47 = arith.truncf %46 : vector<128x128xf32> to vector<128x128xbf16>
      %c0_28 = arith.constant 0 : index
      %c0_29 = arith.constant 0 : index
      %48 = vector.load %arg6[%c0_28, %c0_29] : memref<128x128xbf16, #tpu.memory_space<vmem>>, vector<128x128xbf16>
      %cst_30 = arith.constant dense<0.000000e+00> : vector<128x128xf32>
      %49 = tpu.matmul %47, %48, %cst_30 {dimension_numbers = #tpu.dot_dimension_numbers<[1], [0], [0], [1], [0, 0, 1, 1], [], []>} : vector<128x128xbf16>, vector<128x128xbf16>, vector<128x128xf32> -> vector<128x128xf32>
      %c0_31 = arith.constant 0 : index
      %c0_32 = arith.constant 0 : index
      %50 = vector.load %arg7[%c0_31, %c0_32] : memref<1x128xf32, #tpu.memory_space<vmem>>, vector<1x128xf32>
      %51 = vector.broadcast %50 : vector<1x128xf32> to vector<128x128xf32>
      %52 = arith.addf %49, %51 : vector<128x128xf32>
      %c0_33 = arith.constant 0 : index
      %c0_34 = arith.constant 0 : index
      %53 = vector.load %arg9[%c0_33, %c0_34] : memref<128x128xf32, #tpu.memory_space<vmem>>, vector<128x128xf32>
      tpu.vector_store %arg9[%c0_33, %c0_34], %52 {strides = array<i32>} : memref<128x128xf32, #tpu.memory_space<vmem>>, vector<128x128xf32>,
    } else {
    }
    return
  }
  func.func @transform_0(%arg0: i32, %arg1: i32) -> (i32, i32) {
    %c0_i32 = arith.constant 0 : i32
    %c0_i32_0 = arith.constant 0 : i32
    return %arg0, %c0_i32 : i32, i32
  }
  func.func @transform_1(%arg0: i32, %arg1: i32) -> (i32, i32) {
    %c0_i32 = arith.constant 0 : i32
    %c0_i32_0 = arith.constant 0 : i32
    %c0_i32_1 = arith.constant 0 : i32
    return %c0_i32, %c0_i32_0 : i32, i32
  }
  func.func @transform_2(%arg0: i32, %arg1: i32) -> (i32, i32) {
    %c0_i32 = arith.constant 0 : i32
    %c0_i32_0 = arith.constant 0 : i32
    %c0_i32_1 = arith.constant 0 : i32
    return %c0_i32, %c0_i32_0 : i32, i32
  }
  func.func @transform_3(%arg0: i32, %arg1: i32) -> (i32, i32) {
    %c0_i32 = arith.constant 0 : i32
    %c0_i32_0 = arith.constant 0 : i32
    return %c0_i32, %arg1 : i32, i32
  }
  func.func @transform_4(%arg0: i32, %arg1: i32) -> (i32, i32) {
    %c0_i32 = arith.constant 0 : i32
    %c0_i32_0 = arith.constant 0 : i32
    %c0_i32_1 = arith.constant 0 : i32
    return %c0_i32, %c0_i32_0 : i32, i32
  }
  func.func @transform_5(%arg0: i32, %arg1: i32) -> (i32, i32) {
    %c0_i32 = arith.constant 0 : i32
    %c0_i32_0 = arith.constant 0 : i32
    %c0_i32_1 = arith.constant 0 : i32
    return %c0_i32, %c0_i32_0 : i32, i32
  }
  func.func @transform_6(%arg0: i32, %arg1: i32) -> (i32, i32) {
    %c0_i32 = arith.constant 0 : i32
    return %arg0, %arg1 : i32, i32
  }
  func.func @transform_7(%arg0: i32, %arg1: i32) -> (i32, i32) {
    %c0_i32 = arith.constant 0 : i32
    %c0_i32_0 = arith.constant 0 : i32
    return %arg0, %c0_i32 : i32, i32
  }
}

</mosaic_0001>

<llo_original>
// kernel: tpu_custom_call.1
$region0: #{tpu_custom_call.1}
  #allocation0 [shape = 'u32[]', space=smem, size = 0x4, offset = 0x4, fixed_abs, tag = 'smem constant byte address 0x4 - core index']
  #allocation1 [shape = 'u32[144,128]{1,0:T(1,128)}', space=vmem, size = 0x12000, scoped, tag = 'internal scratch']
  #allocation2 [shape = 'f32[128,128]{1,0:T(8,128)}', space=vmem, size = 0x10000, scoped, tag = 'scratch operand']
  #allocation3 [shape = 'f32[128,1]{1,0:T(8,128)}', space=vmem, size = 0x10000, scoped, tag = 'scratch operand']
  #allocation4 [shape = 'f32[128,1]{1,0:T(8,128)}', space=vmem, size = 0x10000, scoped, tag = 'scratch operand']
  #allocation5 [shape = 'f32[128,128]{1,0:T(8,128)}', space=vmem, size = 0x10000, scoped, tag = 'scratch operand']
  %s0 = inlined_call_operand.hbm [shape: bf16[128,128], index: 0, kind: input, shape index: {}]
  %s1 = inlined_call_operand.hbm [shape: bf16[128,128], index: 1, kind: input, shape index: {}]
  %s2 = inlined_call_operand.vmem [shape: f32[1,128], index: 2, kind: input, shape index: {}]
  %s3 = inlined_call_operand.hbm [shape: bf16[128,128], index: 3, kind: input, shape index: {}]
  %s4 = inlined_call_operand.hbm [shape: bf16[128,128], index: 4, kind: input, shape index: {}]
  %s5 = inlined_call_operand.vmem [shape: f32[1,128], index: 5, kind: input, shape index: {}]
  %s6 = inlined_call_operand.hbm [shape: f32[128,128], index: 6, kind: output, shape index: {0}]
  %s7 = inlined_call_operand.hbm [shape: f32[128,128], index: 7, kind: output, shape index: {1}]
  %8 = xla_tuple %s6, %s7
  %s9 = sld [smem:[#allocation0]]
  $region66: #{tpu_custom_call.1} parent=0
    _
  %s11 = ssub.s32 1, %s9
  %s12 = scalar_select 0, %s11, %s9
  $region1: #{tpu_custom_call.1} parent=0
    #allocation6 [shape = 'u8[32768]{0}', space=vmem, size = 0x8000, scoped, tag = 'input window, operand 0, single buffered']
    #allocation7 [shape = 's32[1]{0}', space=sflag, size = 0x4, scoped, tag = 'scoped memory for tpu_custom_call.1']
    #allocation8 [shape = 's32[1]{0}', space=sflag, size = 0x4, scoped, tag = 'scoped memory for tpu_custom_call.1']
    #allocation9 [shape = 'u8[32768]{0}', space=vmem, size = 0x8000, scoped, tag = 'input window, operand 1, single buffered']
    #allocation10 [shape = 's32[1]{0}', space=sflag, size = 0x4, scoped, tag = 'scoped memory for tpu_custom_call.1']
    #allocation11 [shape = 'u8[32768]{0}', space=vmem, size = 0x8000, scoped, tag = 'input window, operand 3, single buffered']
    #allocation12 [shape = 'u8[32768]{0}', space=vmem, size = 0x8000, scoped, tag = 'input window, operand 4, single buffered']
    #allocation13 [shape = 's32[1]{0}', space=sflag, size = 0x4, scoped, tag = 'scoped memory for tpu_custom_call.1']
    #allocation14 [shape = 'u8[65536]{0}', space=vmem, size = 0x10000, scoped, tag = 'output window, operand 0, single buffered']
    #allocation15 [shape = 'u8[65536]{0}', space=vmem, size = 0x10000, scoped, tag = 'output window, operand 1, single buffered']
    #allocation16 [shape = 's32[1]{0}', space=sflag, size = 0x4, scoped, tag = 'scoped memory for tpu_custom_call.1']
    %13 = vsyncpa [#allocation7], 0
    %14 = vsyncpa [#allocation10], 0
    %15 = vsyncpa [#allocation13], 0
    %16 = vsyncpa [#allocation8], 0
    %17 = vsyncpa [#allocation16], 0
    // Predicated region
    $region2: #{tpu_custom_call.1} parent=1 // pred_check
      _
    $region3: #{tpu_custom_call.1} parent=1 // pred_check_branch
      %19 = sbr.rel (0) target = $region5
    $region4: #{tpu_custom_call.1} parent=1 // pred_region
      %s21 = ssub.s32 1024, 1024
      %22 = vsyncadd [#allocation7], %s21
      %s23 = sshll.u32 [#allocation6], 4
      %s24 = int_to_ptr.vmem [resolvable:$true] %s23
      %29 = dma.hbm_to_vmem [thread:$0]  %s0, 1024, %s24, [#allocation7], 64, 64, 4
    $region5: #{tpu_custom_call.1} parent=1 // pred_fallthru
      _
    // Predicated region
    $region6: #{tpu_custom_call.1} parent=1 // pred_check
      _
    $region7: #{tpu_custom_call.1} parent=1 // pred_check_branch
      %31 = sbr.rel (0) target = $region9
    $region8: #{tpu_custom_call.1} parent=1 // pred_region
      %s33 = ssub.s32 1024, 1024
      %34 = vsyncadd [#allocation10], %s33
      %s35 = sshll.u32 [#allocation9], 4
      %s36 = int_to_ptr.vmem [resolvable:$true] %s35
      %41 = dma.hbm_to_vmem [thread:$0]  %s1, 1024, %s36, [#allocation10], 64, 64, 4
    $region9: #{tpu_custom_call.1} parent=1 // pred_fallthru
      _
    // Predicated region
    $region10: #{tpu_custom_call.1} parent=1 // pred_check
      _
    $region11: #{tpu_custom_call.1} parent=1 // pred_check_branch
      %43 = sbr.rel (0) target = $region13
    $region12: #{tpu_custom_call.1} parent=1 // pred_region
      _
    $region13: #{tpu_custom_call.1} parent=1 // pred_fallthru
      _
    // Predicated region
    $region14: #{tpu_custom_call.1} parent=1 // pred_check
      _
    $region15: #{tpu_custom_call.1} parent=1 // pred_check_branch
      %45 = sbr.rel (0) target = $region17
    $region16: #{tpu_custom_call.1} parent=1 // pred_region
      %s47 = ssub.s32 1024, 1024
      %48 = vsyncadd [#allocation10], %s47
      %s49 = sshll.u32 [#allocation11], 4
      %s50 = int_to_ptr.vmem [resolvable:$true] %s49
      %55 = dma.hbm_to_vmem [thread:$0]  %s3, 1024, %s50, [#allocation10], 64, 64, 4
    $region17: #{tpu_custom_call.1} parent=1 // pred_fallthru
      _
    // Predicated region
    $region18: #{tpu_custom_call.1} parent=1 // pred_check
      _
    $region19: #{tpu_custom_call.1} parent=1 // pred_check_branch
      %57 = sbr.rel (0) target = $region21
    $region20: #{tpu_custom_call.1} parent=1 // pred_region
      %s59 = ssub.s32 1024, 1024
      %60 = vsyncadd [#allocation13], %s59
      %s61 = sshll.u32 [#allocation12], 4
      %s62 = int_to_ptr.vmem [resolvable:$true] %s61
      %67 = dma.hbm_to_vmem [thread:$0]  %s4, 1024, %s62, [#allocation13], 64, 64, 4
    $region21: #{tpu_custom_call.1} parent=1 // pred_fallthru
      _
    // Predicated region
    $region22: #{tpu_custom_call.1} parent=1 // pred_check
      _
    $region23: #{tpu_custom_call.1} parent=1 // pred_check_branch
      %69 = sbr.rel (0) target = $region25
    $region24: #{tpu_custom_call.1} parent=1 // pred_region
      _
    $region25: #{tpu_custom_call.1} parent=1 // pred_fallthru
      _
    // Predicated region
    $region26: #{tpu_custom_call.1} parent=1 // pred_check
      _
    $region27: #{tpu_custom_call.1} parent=1 // pred_check_branch
      %71 = sbr.rel (0) target = $region29
    $region28: #{tpu_custom_call.1} parent=1 // pred_region
      %72 = dma.done [#allocation7], 1024
    $region29: #{tpu_custom_call.1} parent=1 // pred_fallthru
      _
    // Predicated region
    $region30: #{tpu_custom_call.1} parent=1 // pred_check
      _
    $region31: #{tpu_custom_call.1} parent=1 // pred_check_branch
      %74 = sbr.rel (0) target = $region33
    $region32: #{tpu_custom_call.1} parent=1 // pred_region
      %75 = dma.done [#allocation10], 1024
    $region33: #{tpu_custom_call.1} parent=1 // pred_fallthru
      _
    // Predicated region
    $region34: #{tpu_custom_call.1} parent=1 // pred_check
      _
    $region35: #{tpu_custom_call.1} parent=1 // pred_check_branch
      %77 = sbr.rel (0) target = $region37
    $region36: #{tpu_custom_call.1} parent=1 // pred_region
      %78 = dma.done [#allocation10], 1024
    $region37: #{tpu_custom_call.1} parent=1 // pred_fallthru
      _
    // Predicated region
    $region38: #{tpu_custom_call.1} parent=1 // pred_check
      _
    $region39: #{tpu_custom_call.1} parent=1 // pred_check_branch
      %80 = sbr.rel (0) target = $region41
    $region40: #{tpu_custom_call.1} parent=1 // pred_region
      %81 = dma.done [#allocation13], 1024
    $region41: #{tpu_custom_call.1} parent=1 // pred_fallthru
      _
    %p83 = scmp.eq.s32.totalorder 0, 0
    // Predicated region
    $region42: #{tpu_custom_call.1} parent=1 // pred_check
      %p84 = pneg %p83
    $region43: #{tpu_custom_call.1} parent=1 // pred_check_branch
      %86 = sbr.rel (%p84) target = $region45
    $region44: #{tpu_custom_call.1} parent=1 // pred_region
      %v87 = vld [vmem:[#allocation6] sm:$0xf]
      %v88 = vld [vmem:[#allocation6 + $0x4] sm:$0xf]
      %v89 = vld [vmem:[#allocation6 + $0x8] sm:$0xf]
      %v90 = vld [vmem:[#allocation6 + $0xc] sm:$0xf]
      %v91 = vld [vmem:[#allocation6 + $0x10] sm:$0xf]
      %v92 = vld [vmem:[#allocation6 + $0x14] sm:$0xf]
      %v93 = vld [vmem:[#allocation6 + $0x18] sm:$0xf]
      %v94 = vld [vmem:[#allocation6 + $0x1c] sm:$0xf]
      %v95 = vld [vmem:[#allocation6 + $0x20] sm:$0xf]
      %v96 = vld [vmem:[#allocation6 + $0x24] sm:$0xf]
      %v97 = vld [vmem:[#allocation6 + $0x28] sm:$0xf]
      %v98 = vld [vmem:[#allocation6 + $0x2c] sm:$0xf]
      %v99 = vld [vmem:[#allocation6 + $0x30] sm:$0xf]
      %v100 = vld [vmem:[#allocation6 + $0x34] sm:$0xf]
      %v101 = vld [vmem:[#allocation6 + $0x38] sm:$0xf]
      %v102 = vld [vmem:[#allocation6 + $0x3c] sm:$0xf]
      %v103 = vld [vmem:[#allocation9] sm:$0xf]
      %v104 = vld [vmem:[#allocation9 + $0x4] sm:$0xf]
      %v105 = vld [vmem:[#allocation9 + $0x8] sm:$0xf]
      %v106 = vld [vmem:[#allocation9 + $0xc] sm:$0xf]
      %v107 = vld [vmem:[#allocation9 + $0x10] sm:$0xf]
      %v108 = vld [vmem:[#allocation9 + $0x14] sm:$0xf]
      %v109 = vld [vmem:[#allocation9 + $0x18] sm:$0xf]
      %v110 = vld [vmem:[#allocation9 + $0x1c] sm:$0xf]
      %v111 = vld [vmem:[#allocation9 + $0x20] sm:$0xf]
      %v112 = vld [vmem:[#allocation9 + $0x24] sm:$0xf]
      %v113 = vld [vmem:[#allocation9 + $0x28] sm:$0xf]
      %v114 = vld [vmem:[#allocation9 + $0x2c] sm:$0xf]
      %v115 = vld [vmem:[#allocation9 + $0x30] sm:$0xf]
      %v116 = vld [vmem:[#allocation9 + $0x34] sm:$0xf]
      %v117 = vld [vmem:[#allocation9 + $0x38] sm:$0xf]
      %v118 = vld [vmem:[#allocation9 + $0x3c] sm:$0xf]
      %v119 = vld [vmem:[%s2] sm:$0x1]
      %v121 = vlaneseq
      %v122 = vshrl.u32 %v121, 7
      %v123 = vsub.s32 0, %v122
      %v124 = vrot.slane %v119, %v123
      %v142 = vunpack.c.l.b16 %v87
      %v143 = vunpack.c.l.b16 %v88
      %v144 = vunpack.c.l.b16 %v89
      %v145 = vunpack.c.l.b16 %v90
      %v146 = vunpack.c.l.b16 %v91
      %v147 = vunpack.c.l.b16 %v92
      %v148 = vunpack.c.l.b16 %v93
      %v149 = vunpack.c.l.b16 %v94
      %v150 = vunpack.c.l.b16 %v95
      %v151 = vunpack.c.l.b16 %v96
      %v152 = vunpack.c.l.b16 %v97
      %v153 = vunpack.c.l.b16 %v98
      %v154 = vunpack.c.l.b16 %v99
      %v155 = vunpack.c.l.b16 %v100
      %v156 = vunpack.c.l.b16 %v101
      %v157 = vunpack.c.l.b16 %v102
      %v158 = vpack.c.b16 %v143, %v142
      %v159 = vpack.c.b16 %v145, %v144
      %v160 = vpack.c.b16 %v147, %v146
      %v161 = vpack.c.b16 %v149, %v148
      %v162 = vpack.c.b16 %v151, %v150
      %v163 = vpack.c.b16 %v153, %v152
      %v164 = vpack.c.b16 %v155, %v154
      %v165 = vpack.c.b16 %v157, %v156
      %v190 = vunpack.c.l.b16 %v103
      %v191 = vunpack.c.l.b16 %v104
      %v192 = vunpack.c.l.b16 %v105
      %v193 = vunpack.c.l.b16 %v106
      %v194 = vunpack.c.l.b16 %v107
      %v195 = vunpack.c.l.b16 %v108
      %v196 = vunpack.c.l.b16 %v109
      %v197 = vunpack.c.l.b16 %v110
      %v198 = vunpack.c.l.b16 %v111
      %v199 = vunpack.c.l.b16 %v112
      %v200 = vunpack.c.l.b16 %v113
      %v201 = vunpack.c.l.b16 %v114
      %v202 = vunpack.c.l.b16 %v115
      %v203 = vunpack.c.l.b16 %v116
      %v204 = vunpack.c.l.b16 %v117
      %v205 = vunpack.c.l.b16 %v118
      %v206 = vpack.c.b16 %v191, %v190
      %v207 = vpack.c.b16 %v193, %v192
      %v208 = vpack.c.b16 %v195, %v194
      %v209 = vpack.c.b16 %v197, %v196
      %v210 = vpack.c.b16 %v199, %v198
      %v211 = vpack.c.b16 %v201, %v200
      %v212 = vpack.c.b16 %v203, %v202
      %v213 = vpack.c.b16 %v205, %v204
      %222 = vmatprep.subr.bf16.mxu0 0
      %223 = vmatpush1.bf16.msra.mxu0 %v206
      %224 = vmatprep.subr.bf16.mxu0 0
      %225 = vmatpush1.bf16.msra.mxu0 %v207
      %226 = vmatprep.subr.bf16.mxu0 0
      %227 = vmatpush1.bf16.msra.mxu0 %v208
      %228 = vmatprep.subr.bf16.mxu0 0
      %229 = vmatpush1.bf16.msra.mxu0 %v209
      %230 = vmatprep.subr.bf16.mxu0 0
      %231 = vmatpush1.bf16.msra.mxu0 %v210
      %232 = vmatprep.subr.bf16.mxu0 0
      %233 = vmatpush1.bf16.msra.mxu0 %v211
      %234 = vmatprep.subr.bf16.mxu0 0
      %235 = vmatpush1.bf16.msra.mxu0 %v212
      %236 = vmatprep.subr.bf16.mxu0 0
      %237 = vmatpush1.bf16.msra.mxu0 %v213
      %238 = vmatprep.subr.bf16.mxu0 0
      %239 = vmatpush1.bf16.msra.mxu0 0
      %240 = vmatprep.subr.bf16.mxu0 0
      %241 = vmatpush1.bf16.msra.mxu0 0
      %242 = vmatprep.subr.bf16.mxu0 0
      %243 = vmatpush1.bf16.msra.mxu0 0
      %244 = vmatprep.subr.bf16.mxu0 0
      %245 = vmatpush1.bf16.msra.mxu0 0
      %246 = vmatprep.subr.bf16.mxu0 0
      %247 = vmatpush1.bf16.msra.mxu0 0
      %248 = vmatprep.subr.bf16.mxu0 0
      %249 = vmatpush1.bf16.msra.mxu0 0
      %250 = vmatprep.subr.bf16.mxu0 0
      %251 = vmatpush1.bf16.msra.mxu0 0
      %252 = vmatprep.subr.bf16.mxu0 0
      %253 = vmatpush1.bf16.msra.mxu0 0
      %254 = vmatprep.mubr.bf16.mxu0 0
      %255 = vmatmul.mubr.bf16.gmra.mrb[0].mxu0 %v158
      %v256 = vpop.f32.mrb[0].mxu0
      %v257 = vadd.f32 %v124, %v256
      %v258 = vpop.f32.mrb[0].mxu0
      %v259 = vpop.f32.mrb[0].mxu0
      %v260 = vadd.f32 %v124, %v259
      %v261 = vpop.f32.mrb[0].mxu0
      %262 = vmatprep.mubr.bf16.mxu0 0
      %263 = vmatmul.mubr.bf16.gmra.mrb[0].mxu0 %v159
      %v264 = vpop.f32.mrb[0].mxu0
      %v265 = vadd.f32 %v124, %v264
      %v266 = vpop.f32.mrb[0].mxu0
      %v267 = vpop.f32.mrb[0].mxu0
      %v268 = vadd.f32 %v124, %v267
      %v269 = vpop.f32.mrb[0].mxu0
      %270 = vmatprep.mubr.bf16.mxu0 0
      %271 = vmatmul.mubr.bf16.gmra.mrb[0].mxu0 %v160
      %v272 = vpop.f32.mrb[0].mxu0
      %v273 = vadd.f32 %v124, %v272
      %v274 = vpop.f32.mrb[0].mxu0
      %v275 = vpop.f32.mrb[0].mxu0
      %v276 = vadd.f32 %v124, %v275
      %v277 = vpop.f32.mrb[0].mxu0
      %278 = vmatprep.mubr.bf16.mxu0 0
      %279 = vmatmul.mubr.bf16.gmra.mrb[0].mxu0 %v161
      %v280 = vpop.f32.mrb[0].mxu0
      %v281 = vadd.f32 %v124, %v280
      %v282 = vpop.f32.mrb[0].mxu0
      %v283 = vpop.f32.mrb[0].mxu0
      %v284 = vadd.f32 %v124, %v283
      %v285 = vpop.f32.mrb[0].mxu0
      %286 = vmatprep.mubr.bf16.mxu0 0
      %287 = vmatmul.mubr.bf16.gmra.mrb[0].mxu0 %v162
      %v288 = vpop.f32.mrb[0].mxu0
      %v289 = vadd.f32 %v124, %v288
      %v290 = vpop.f32.mrb[0].mxu0
      %v291 = vpop.f32.mrb[0].mxu0
      %v292 = vadd.f32 %v124, %v291
      %v293 = vpop.f32.mrb[0].mxu0
      %294 = vmatprep.mubr.bf16.mxu0 0
      %295 = vmatmul.mubr.bf16.gmra.mrb[0].mxu0 %v163
      %v296 = vpop.f32.mrb[0].mxu0
      %v297 = vadd.f32 %v124, %v296
      %v298 = vpop.f32.mrb[0].mxu0
      %v299 = vpop.f32.mrb[0].mxu0
      %v300 = vadd.f32 %v124, %v299
      %v301 = vpop.f32.mrb[0].mxu0
      %302 = vmatprep.mubr.bf16.mxu0 0
      %303 = vmatmul.mubr.bf16.gmra.mrb[0].mxu0 %v164
      %v304 = vpop.f32.mrb[0].mxu0
      %v305 = vadd.f32 %v124, %v304
      %v306 = vpop.f32.mrb[0].mxu0
      %v307 = vpop.f32.mrb[0].mxu0
      %v308 = vadd.f32 %v124, %v307
      %v309 = vpop.f32.mrb[0].mxu0
      %310 = vmatprep.mubr.bf16.mxu0 0
      %311 = vmatmul.mubr.bf16.gmra.mrb[0].mxu0 %v165
      %v312 = vpop.f32.mrb[0].mxu0
      %v313 = vadd.f32 %v124, %v312
      %v314 = vpop.f32.mrb[0].mxu0
      %v315 = vpop.f32.mrb[0].mxu0
      %v316 = vadd.f32 %v124, %v315
      %v317 = vpop.f32.mrb[0].mxu0
      %318 = vdwg.mxu0
      %319 = vst [vmem:[#allocation2] sm:$0xff] %v257
      %320 = vst [vmem:[#allocation2 + $0x8] sm:$0xff] %v260
      %321 = vst [vmem:[#allocation2 + $0x10] sm:$0xff] %v265
      %322 = vst [vmem:[#allocation2 + $0x18] sm:$0xff] %v268
      %323 = vst [vmem:[#allocation2 + $0x20] sm:$0xff] %v273
      %324 = vst [vmem:[#allocation2 + $0x28] sm:$0xff] %v276
      %325 = vst [vmem:[#allocation2 + $0x30] sm:$0xff] %v281
      %326 = vst [vmem:[#allocation2 + $0x38] sm:$0xff] %v284
      %327 = vst [vmem:[#allocation2 + $0x40] sm:$0xff] %v289
      %328 = vst [vmem:[#allocation2 + $0x48] sm:$0xff] %v292
      %329 = vst [vmem:[#allocation2 + $0x50] sm:$0xff] %v297
      %330 = vst [vmem:[#allocation2 + $0x58] sm:$0xff] %v300
      %331 = vst [vmem:[#allocation2 + $0x60] sm:$0xff] %v305
      %332 = vst [vmem:[#allocation2 + $0x68] sm:$0xff] %v308
      %333 = vst [vmem:[#allocation2 + $0x70] sm:$0xff] %v313
      %334 = vst [vmem:[#allocation2 + $0x78] sm:$0xff] %v316
      %vm335 = vcmask 7168
      %336 = vst.msk [vmem:[#allocation3] sm:$0xff] %vm335, -inf
      %337 = vst.msk [vmem:[#allocation3 + $0x8] sm:$0xff] %vm335, -inf
      %338 = vst.msk [vmem:[#allocation3 + $0x10] sm:$0xff] %vm335, -inf
      %339 = vst.msk [vmem:[#allocation3 + $0x18] sm:$0xff] %vm335, -inf
      %340 = vst.msk [vmem:[#allocation3 + $0x20] sm:$0xff] %vm335, -inf
      %341 = vst.msk [vmem:[#allocation3 + $0x28] sm:$0xff] %vm335, -inf
      %342 = vst.msk [vmem:[#allocation3 + $0x30] sm:$0xff] %vm335, -inf
      %343 = vst.msk [vmem:[#allocation3 + $0x38] sm:$0xff] %vm335, -inf
      %344 = vst.msk [vmem:[#allocation3 + $0x40] sm:$0xff] %vm335, -inf
      %345 = vst.msk [vmem:[#allocation3 + $0x48] sm:$0xff] %vm335, -inf
      %346 = vst.msk [vmem:[#allocation3 + $0x50] sm:$0xff] %vm335, -inf
      %347 = vst.msk [vmem:[#allocation3 + $0x58] sm:$0xff] %vm335, -inf
      %348 = vst.msk [vmem:[#allocation3 + $0x60] sm:$0xff] %vm335, -inf
      %349 = vst.msk [vmem:[#allocation3 + $0x68] sm:$0xff] %vm335, -inf
      %350 = vst.msk [vmem:[#allocation3 + $0x70] sm:$0xff] %vm335, -inf
      %351 = vst.msk [vmem:[#allocation3 + $0x78] sm:$0xff] %vm335, -inf
      %352 = vst.msk [vmem:[#allocation4] sm:$0xff] %vm335, 0.0
      %353 = vst.msk [vmem:[#allocation4 + $0x8] sm:$0xff] %vm335, 0.0
      %354 = vst.msk [vmem:[#allocation4 + $0x10] sm:$0xff] %vm335, 0.0
      %355 = vst.msk [vmem:[#allocation4 + $0x18] sm:$0xff] %vm335, 0.0
      %356 = vst.msk [vmem:[#allocation4 + $0x20] sm:$0xff] %vm335, 0.0
      %357 = vst.msk [vmem:[#allocation4 + $0x28] sm:$0xff] %vm335, 0.0
      %358 = vst.msk [vmem:[#allocation4 + $0x30] sm:$0xff] %vm335, 0.0
      %359 = vst.msk [vmem:[#allocation4 + $0x38] sm:$0xff] %vm335, 0.0
      %360 = vst.msk [vmem:[#allocation4 + $0x40] sm:$0xff] %vm335, 0.0
      %361 = vst.msk [vmem:[#allocation4 + $0x48] sm:$0xff] %vm335, 0.0
      %362 = vst.msk [vmem:[#allocation4 + $0x50] sm:$0xff] %vm335, 0.0
      %363 = vst.msk [vmem:[#allocation4 + $0x58] sm:$0xff] %vm335, 0.0
      %364 = vst.msk [vmem:[#allocation4 + $0x60] sm:$0xff] %vm335, 0.0
      %365 = vst.msk [vmem:[#allocation4 + $0x68] sm:$0xff] %vm335, 0.0
      %366 = vst.msk [vmem:[#allocation4 + $0x70] sm:$0xff] %vm335, 0.0
      %367 = vst.msk [vmem:[#allocation4 + $0x78] sm:$0xff] %vm335, 0.0
      %368 = vst [vmem:[#allocation5] sm:$0xff] 0.0
      %369 = vst [vmem:[#allocation5 + $0x8] sm:$0xff] 0.0
      %370 = vst [vmem:[#allocation5 + $0x10] sm:$0xff] 0.0
      %371 = vst [vmem:[#allocation5 + $0x18] sm:$0xff] 0.0
      %372 = vst [vmem:[#allocation5 + $0x20] sm:$0xff] 0.0
      %373 = vst [vmem:[#allocation5 + $0x28] sm:$0xff] 0.0
      %374 = vst [vmem:[#allocation5 + $0x30] sm:$0xff] 0.0
      %375 = vst [vmem:[#allocation5 + $0x38] sm:$0xff] 0.0
      %376 = vst [vmem:[#allocation5 + $0x40] sm:$0xff] 0.0
      %377 = vst [vmem:[#allocation5 + $0x48] sm:$0xff] 0.0
      %378 = vst [vmem:[#allocation5 + $0x50] sm:$0xff] 0.0
      %379 = vst [vmem:[#allocation5 + $0x58] sm:$0xff] 0.0
      %380 = vst [vmem:[#allocation5 + $0x60] sm:$0xff] 0.0
      %381 = vst [vmem:[#allocation5 + $0x68] sm:$0xff] 0.0
      %382 = vst [vmem:[#allocation5 + $0x70] sm:$0xff] 0.0
      %383 = vst [vmem:[#allocation5 + $0x78] sm:$0xff] 0.0
    $region45: #{tpu_custom_call.1} parent=1 // pred_fallthru
      _
    %v384 = vld [vmem:[#allocation11] sm:$0xf]
    %v385 = vld [vmem:[#allocation11 + $0x4] sm:$0xf]
    %v386 = vld [vmem:[#allocation11 + $0x8] sm:$0xf]
    %v387 = vld [vmem:[#allocation11 + $0xc] sm:$0xf]
    %v388 = vld [vmem:[#allocation11 + $0x10] sm:$0xf]
    %v389 = vld [vmem:[#allocation11 + $0x14] sm:$0xf]
    %v390 = vld [vmem:[#allocation11 + $0x18] sm:$0xf]
    %v391 = vld [vmem:[#allocation11 + $0x1c] sm:$0xf]
    %v392 = vld [vmem:[#allocation11 + $0x20] sm:$0xf]
    %v393 = vld [vmem:[#allocation11 + $0x24] sm:$0xf]
    %v394 = vld [vmem:[#allocation11 + $0x28] sm:$0xf]
    %v395 = vld [vmem:[#allocation11 + $0x2c] sm:$0xf]
    %v396 = vld [vmem:[#allocation11 + $0x30] sm:$0xf]
    %v397 = vld [vmem:[#allocation11 + $0x34] sm:$0xf]
    %v398 = vld [vmem:[#allocation11 + $0x38] sm:$0xf]
    %v399 = vld [vmem:[#allocation11 + $0x3c] sm:$0xf]
    %v400 = vld [vmem:[#allocation2] sm:$0xff]
    %v401 = vld [vmem:[#allocation2 + $0x8] sm:$0xff]
    %v402 = vld [vmem:[#allocation2 + $0x10] sm:$0xff]
    %v403 = vld [vmem:[#allocation2 + $0x18] sm:$0xff]
    %v404 = vld [vmem:[#allocation2 + $0x20] sm:$0xff]
    %v405 = vld [vmem:[#allocation2 + $0x28] sm:$0xff]
    %v406 = vld [vmem:[#allocation2 + $0x30] sm:$0xff]
    %v407 = vld [vmem:[#allocation2 + $0x38] sm:$0xff]
    %v408 = vld [vmem:[#allocation2 + $0x40] sm:$0xff]
    %v409 = vld [vmem:[#allocation2 + $0x48] sm:$0xff]
    %v410 = vld [vmem:[#allocation2 + $0x50] sm:$0xff]
    %v411 = vld [vmem:[#allocation2 + $0x58] sm:$0xff]
    %v412 = vld [vmem:[#allocation2 + $0x60] sm:$0xff]
    %v413 = vld [vmem:[#allocation2 + $0x68] sm:$0xff]
    %v414 = vld [vmem:[#allocation2 + $0x70] sm:$0xff]
    %v415 = vld [vmem:[#allocation2 + $0x78] sm:$0xff]
    %v416 = vpack.c.bf16 %v401, %v400
    %v417 = vpack.c.bf16 %v403, %v402
    %v418 = vpack.c.bf16 %v405, %v404
    %v419 = vpack.c.bf16 %v407, %v406
    %v420 = vpack.c.bf16 %v409, %v408
    %v421 = vpack.c.bf16 %v411, %v410
    %v422 = vpack.c.bf16 %v413, %v412
    %v423 = vpack.c.bf16 %v415, %v414
    %v440 = vunpack.c.l.b16 %v384
    %v441 = vunpack.c.l.b16 %v385
    %v442 = vunpack.c.l.b16 %v386
    %v443 = vunpack.c.l.b16 %v387
    %v444 = vunpack.c.l.b16 %v388
    %v445 = vunpack.c.l.b16 %v389
    %v446 = vunpack.c.l.b16 %v390
    %v447 = vunpack.c.l.b16 %v391
    %v448 = vunpack.c.l.b16 %v392
    %v449 = vunpack.c.l.b16 %v393
    %v450 = vunpack.c.l.b16 %v394
    %v451 = vunpack.c.l.b16 %v395
    %v452 = vunpack.c.l.b16 %v396
    %v453 = vunpack.c.l.b16 %v397
    %v454 = vunpack.c.l.b16 %v398
    %v455 = vunpack.c.l.b16 %v399
    %v456 = vpack.c.b16 %v441, %v440
    %v457 = vpack.c.b16 %v443, %v442
    %v458 = vpack.c.b16 %v445, %v444
    %v459 = vpack.c.b16 %v447, %v446
    %v460 = vpack.c.b16 %v449, %v448
    %v461 = vpack.c.b16 %v451, %v450
    %v462 = vpack.c.b16 %v453, %v452
    %v463 = vpack.c.b16 %v455, %v454
    %472 = vmatprep.subr.bf16.mxu0 0
    %473 = vmatpush1.bf16.msra.mxu0 %v456
    %474 = vmatprep.subr.bf16.mxu0 0
    %475 = vmatpush1.bf16.msra.mxu0 %v457
    %476 = vmatprep.subr.bf16.mxu0 0
    %477 = vmatpush1.bf16.msra.mxu0 %v458
    %478 = vmatprep.subr.bf16.mxu0 0
    %479 = vmatpush1.bf16.msra.mxu0 %v459
    %480 = vmatprep.subr.bf16.mxu0 0
    %481 = vmatpush1.bf16.msra.mxu0 %v460
    %482 = vmatprep.subr.bf16.mxu0 0
    %483 = vmatpush1.bf16.msra.mxu0 %v461
    %484 = vmatprep.subr.bf16.mxu0 0
    %485 = vmatpush1.bf16.msra.mxu0 %v462
    %486 = vmatprep.subr.bf16.mxu0 0
    %487 = vmatpush1.bf16.msra.mxu0 %v463
    %488 = vmatprep.subr.bf16.mxu0 0
    %489 = vmatpush1.bf16.msra.mxu0 0
    %490 = vmatprep.subr.bf16.mxu0 0
    %491 = vmatpush1.bf16.msra.mxu0 0
    %492 = vmatprep.subr.bf16.mxu0 0
    %493 = vmatpush1.bf16.msra.mxu0 0
    %494 = vmatprep.subr.bf16.mxu0 0
    %495 = vmatpush1.bf16.msra.mxu0 0
    %496 = vmatprep.subr.bf16.mxu0 0
    %497 = vmatpush1.bf16.msra.mxu0 0
    %498 = vmatprep.subr.bf16.mxu0 0
    %499 = vmatpush1.bf16.msra.mxu0 0
    %500 = vmatprep.subr.bf16.mxu0 0
    %501 = vmatpush1.bf16.msra.mxu0 0
    %502 = vmatprep.subr.bf16.mxu0 0
    %503 = vmatpush1.bf16.msra.mxu0 0
    %504 = vmatprep.mubr.bf16.mxu0 0
    %505 = vmatmul.mubr.bf16.gmra.mrb[0].mxu0 %v416
    %v506 = vpop.f32.mrb[0].mxu0
    %v507 = vadd.f32 0.0, %v506
    %v508 = vpop.f32.mrb[0].mxu0
    %v509 = vpop.f32.mrb[0].mxu0
    %v510 = vadd.f32 0.0, %v509
    %v511 = vpop.f32.mrb[0].mxu0
    %512 = vmatprep.mubr.bf16.mxu0 0
    %513 = vmatmul.mubr.bf16.gmra.mrb[0].mxu0 %v417
    %v514 = vpop.f32.mrb[0].mxu0
    %v515 = vadd.f32 0.0, %v514
    %v516 = vpop.f32.mrb[0].mxu0
    %v517 = vpop.f32.mrb[0].mxu0
    %v518 = vadd.f32 0.0, %v517
    %v519 = vpop.f32.mrb[0].mxu0
    %520 = vmatprep.mubr.bf16.mxu0 0
    %521 = vmatmul.mubr.bf16.gmra.mrb[0].mxu0 %v418
    %v522 = vpop.f32.mrb[0].mxu0
    %v523 = vadd.f32 0.0, %v522
    %v524 = vpop.f32.mrb[0].mxu0
    %v525 = vpop.f32.mrb[0].mxu0
    %v526 = vadd.f32 0.0, %v525
    %v527 = vpop.f32.mrb[0].mxu0
    %528 = vmatprep.mubr.bf16.mxu0 0
    %529 = vmatmul.mubr.bf16.gmra.mrb[0].mxu0 %v419
    %v530 = vpop.f32.mrb[0].mxu0
    %v531 = vadd.f32 0.0, %v530
    %v532 = vpop.f32.mrb[0].mxu0
    %v533 = vpop.f32.mrb[0].mxu0
    %v534 = vadd.f32 0.0, %v533
    %v535 = vpop.f32.mrb[0].mxu0
    %536 = vmatprep.mubr.bf16.mxu0 0
    %537 = vmatmul.mubr.bf16.gmra.mrb[0].mxu0 %v420
    %v538 = vpop.f32.mrb[0].mxu0
    %v539 = vadd.f32 0.0, %v538
    %v540 = vpop.f32.mrb[0].mxu0
    %v541 = vpop.f32.mrb[0].mxu0
    %v542 = vadd.f32 0.0, %v541
    %v543 = vpop.f32.mrb[0].mxu0
    %544 = vmatprep.mubr.bf16.mxu0 0
    %545 = vmatmul.mubr.bf16.gmra.mrb[0].mxu0 %v421
    %v546 = vpop.f32.mrb[0].mxu0
    %v547 = vadd.f32 0.0, %v546
    %v548 = vpop.f32.mrb[0].mxu0
    %v549 = vpop.f32.mrb[0].mxu0
    %v550 = vadd.f32 0.0, %v549
    %v551 = vpop.f32.mrb[0].mxu0
    %552 = vmatprep.mubr.bf16.mxu0 0
    %553 = vmatmul.mubr.bf16.gmra.mrb[0].mxu0 %v422
    %v554 = vpop.f32.mrb[0].mxu0
    %v555 = vadd.f32 0.0, %v554
    %v556 = vpop.f32.mrb[0].mxu0
    %v557 = vpop.f32.mrb[0].mxu0
    %v558 = vadd.f32 0.0, %v557
    %v559 = vpop.f32.mrb[0].mxu0
    %560 = vmatprep.mubr.bf16.mxu0 0
    %561 = vmatmul.mubr.bf16.gmra.mrb[0].mxu0 %v423
    %v562 = vpop.f32.mrb[0].mxu0
    %v563 = vadd.f32 0.0, %v562
    %v564 = vpop.f32.mrb[0].mxu0
    %v565 = vpop.f32.mrb[0].mxu0
    %v566 = vadd.f32 0.0, %v565
    %v567 = vpop.f32.mrb[0].mxu0
    %568 = vdwg.mxu0
    %569 = vst [vmem:[#allocation14] sm:$0xff] %v507
    %570 = vst [vmem:[#allocation14 + $0x8] sm:$0xff] %v510
    %571 = vst [vmem:[#allocation14 + $0x10] sm:$0xff] %v515
    %572 = vst [vmem:[#allocation14 + $0x18] sm:$0xff] %v518
    %573 = vst [vmem:[#allocation14 + $0x20] sm:$0xff] %v523
    %574 = vst [vmem:[#allocation14 + $0x28] sm:$0xff] %v526
    %575 = vst [vmem:[#allocation14 + $0x30] sm:$0xff] %v531
    %576 = vst [vmem:[#allocation14 + $0x38] sm:$0xff] %v534
    %577 = vst [vmem:[#allocation14 + $0x40] sm:$0xff] %v539
    %578 = vst [vmem:[#allocation14 + $0x48] sm:$0xff] %v542
    %579 = vst [vmem:[#allocation14 + $0x50] sm:$0xff] %v547
    %580 = vst [vmem:[#allocation14 + $0x58] sm:$0xff] %v550
    %581 = vst [vmem:[#allocation14 + $0x60] sm:$0xff] %v555
    %582 = vst [vmem:[#allocation14 + $0x68] sm:$0xff] %v558
    %583 = vst [vmem:[#allocation14 + $0x70] sm:$0xff] %v563
    %584 = vst [vmem:[#allocation14 + $0x78] sm:$0xff] %v566
    %s585 = smul.u32 0, 128
    %v586 = vlaneseq
    %v587 = vand.u32 %v586, 127
    %v588 = vstv %s585
    %v589 = vadd.s32 %v588, %v587
    %vm590 = vcmp.lt.s32.totalorder %v589, 64
    %v591 = vsel %vm590, %v507, -1e+30
    %v592 = vsel %vm590, %v510, -1e+30
    %v593 = vsel %vm590, %v515, -1e+30
    %v594 = vsel %vm590, %v518, -1e+30
    %v595 = vsel %vm590, %v523, -1e+30
    %v596 = vsel %vm590, %v526, -1e+30
    %v597 = vsel %vm590, %v531, -1e+30
    %v598 = vsel %vm590, %v534, -1e+30
    %v599 = vsel %vm590, %v539, -1e+30
    %v600 = vsel %vm590, %v542, -1e+30
    %v601 = vsel %vm590, %v547, -1e+30
    %v602 = vsel %vm590, %v550, -1e+30
    %v603 = vsel %vm590, %v555, -1e+30
    %v604 = vsel %vm590, %v558, -1e+30
    %v605 = vsel %vm590, %v563, -1e+30
    %v606 = vsel %vm590, %v566, -1e+30
    %v607 = vld [vmem:[#allocation3] sm:$0xff]
    %v608 = vld [vmem:[#allocation3 + $0x8] sm:$0xff]
    %v609 = vld [vmem:[#allocation3 + $0x10] sm:$0xff]
    %v610 = vld [vmem:[#allocation3 + $0x18] sm:$0xff]
    %v611 = vld [vmem:[#allocation3 + $0x20] sm:$0xff]
    %v612 = vld [vmem:[#allocation3 + $0x28] sm:$0xff]
    %v613 = vld [vmem:[#allocation3 + $0x30] sm:$0xff]
    %v614 = vld [vmem:[#allocation3 + $0x38] sm:$0xff]
    %v615 = vld [vmem:[#allocation3 + $0x40] sm:$0xff]
    %v616 = vld [vmem:[#allocation3 + $0x48] sm:$0xff]
    %v617 = vld [vmem:[#allocation3 + $0x50] sm:$0xff]
    %v618 = vld [vmem:[#allocation3 + $0x58] sm:$0xff]
    %v619 = vld [vmem:[#allocation3 + $0x60] sm:$0xff]
    %v620 = vld [vmem:[#allocation3 + $0x68] sm:$0xff]
    %v621 = vld [vmem:[#allocation3 + $0x70] sm:$0xff]
    %v622 = vld [vmem:[#allocation3 + $0x78] sm:$0xff]
    %623 = vmax.xlane.f32.xlu0 %v591
    %v624 = vpop.xlane.xlu0 %623
    %625 = vmax.xlane.f32.xlu0 %v592
    %v626 = vpop.xlane.xlu0 %625
    %627 = vmax.xlane.f32.xlu0 %v593
    %v628 = vpop.xlane.xlu0 %627
    %629 = vmax.xlane.f32.xlu0 %v594
    %v630 = vpop.xlane.xlu0 %629
    %631 = vmax.xlane.f32.xlu0 %v595
    %v632 = vpop.xlane.xlu0 %631
    %633 = vmax.xlane.f32.xlu0 %v596
    %v634 = vpop.xlane.xlu0 %633
    %635 = vmax.xlane.f32.xlu0 %v597
    %v636 = vpop.xlane.xlu0 %635
    %637 = vmax.xlane.f32.xlu0 %v598
    %v638 = vpop.xlane.xlu0 %637
    %639 = vmax.xlane.f32.xlu0 %v599
    %v640 = vpop.xlane.xlu0 %639
    %641 = vmax.xlane.f32.xlu0 %v600
    %v642 = vpop.xlane.xlu0 %641
    %643 = vmax.xlane.f32.xlu0 %v601
    %v644 = vpop.xlane.xlu0 %643
    %645 = vmax.xlane.f32.xlu0 %v602
    %v646 = vpop.xlane.xlu0 %645
    %647 = vmax.xlane.f32.xlu0 %v603
    %v648 = vpop.xlane.xlu0 %647
    %649 = vmax.xlane.f32.xlu0 %v604
    %v650 = vpop.xlane.xlu0 %649
    %651 = vmax.xlane.f32.xlu0 %v605
    %v652 = vpop.xlane.xlu0 %651
    %653 = vmax.xlane.f32.xlu0 %v606
    %v654 = vpop.xlane.xlu0 %653
    %v655 = vmax.f32 %v607, %v624
    %v656 = vmax.f32 %v608, %v626
    %v657 = vmax.f32 %v609, %v628
    %v658 = vmax.f32 %v610, %v630
    %v659 = vmax.f32 %v611, %v632
    %v660 = vmax.f32 %v612, %v634
    %v661 = vmax.f32 %v613, %v636
    %v662 = vmax.f32 %v614, %v638
    %v663 = vmax.f32 %v615, %v640
    %v664 = vmax.f32 %v616, %v642
    %v665 = vmax.f32 %v617, %v644
    %v666 = vmax.f32 %v618, %v646
    %v667 = vmax.f32 %v619, %v648
    %v668 = vmax.f32 %v620, %v650
    %v669 = vmax.f32 %v621, %v652
    %v670 = vmax.f32 %v622, %v654
    %v671 = vsub.f32 %v607, %v655
    %v672 = vsub.f32 %v608, %v656
    %v673 = vsub.f32 %v609, %v657
    %v674 = vsub.f32 %v610, %v658
    %v675 = vsub.f32 %v611, %v659
    %v676 = vsub.f32 %v612, %v660
    %v677 = vsub.f32 %v613, %v661
    %v678 = vsub.f32 %v614, %v662
    %v679 = vsub.f32 %v615, %v663
    %v680 = vsub.f32 %v616, %v664
    %v681 = vsub.f32 %v617, %v665
    %v682 = vsub.f32 %v618, %v666
    %v683 = vsub.f32 %v619, %v667
    %v684 = vsub.f32 %v620, %v668
    %v685 = vsub.f32 %v621, %v669
    %v686 = vsub.f32 %v622, %v670
    %v687 = vmul.f32 %v671, 1.442695
    %v688 = vpow.pop %v687
    %v689 = vmul.f32 %v672, 1.442695
    %v690 = vpow.pop %v689
    %v691 = vmul.f32 %v673, 1.442695
    %v692 = vpow.pop %v691
    %v693 = vmul.f32 %v674, 1.442695
    %v694 = vpow.pop %v693
    %v695 = vmul.f32 %v675, 1.442695
    %v696 = vpow.pop %v695
    %v697 = vmul.f32 %v676, 1.442695
    %v698 = vpow.pop %v697
    %v699 = vmul.f32 %v677, 1.442695
    %v700 = vpow.pop %v699
    %v701 = vmul.f32 %v678, 1.442695
    %v702 = vpow.pop %v701
    %v703 = vmul.f32 %v679, 1.442695
    %v704 = vpow.pop %v703
    %v705 = vmul.f32 %v680, 1.442695
    %v706 = vpow.pop %v705
    %v707 = vmul.f32 %v681, 1.442695
    %v708 = vpow.pop %v707
    %v709 = vmul.f32 %v682, 1.442695
    %v710 = vpow.pop %v709
    %v711 = vmul.f32 %v683, 1.442695
    %v712 = vpow.pop %v711
    %v713 = vmul.f32 %v684, 1.442695
    %v714 = vpow.pop %v713
    %v715 = vmul.f32 %v685, 1.442695
    %v716 = vpow.pop %v715
    %v717 = vmul.f32 %v686, 1.442695
    %v718 = vpow.pop %v717
    %720 = vset.pattern.permute.xlu0 0
    %721 = vperm.xlu0 %720, %v655
    %v722 = vpop.permute.xlu0 %721
    %725 = vset.pattern.permute.xlu0 0
    %726 = vperm.xlu0 %725, %v656
    %v727 = vpop.permute.xlu0 %726
    %730 = vset.pattern.permute.xlu0 0
    %731 = vperm.xlu0 %730, %v657
    %v732 = vpop.permute.xlu0 %731
    %735 = vset.pattern.permute.xlu0 0
    %736 = vperm.xlu0 %735, %v658
    %v737 = vpop.permute.xlu0 %736
    %740 = vset.pattern.permute.xlu0 0
    %741 = vperm.xlu0 %740, %v659
    %v742 = vpop.permute.xlu0 %741
    %745 = vset.pattern.permute.xlu0 0
    %746 = vperm.xlu0 %745, %v660
    %v747 = vpop.permute.xlu0 %746
    %750 = vset.pattern.permute.xlu0 0
    %751 = vperm.xlu0 %750, %v661
    %v752 = vpop.permute.xlu0 %751
    %755 = vset.pattern.permute.xlu0 0
    %756 = vperm.xlu0 %755, %v662
    %v757 = vpop.permute.xlu0 %756
    %760 = vset.pattern.permute.xlu0 0
    %761 = vperm.xlu0 %760, %v663
    %v762 = vpop.permute.xlu0 %761
    %765 = vset.pattern.permute.xlu0 0
    %766 = vperm.xlu0 %765, %v664
    %v767 = vpop.permute.xlu0 %766
    %770 = vset.pattern.permute.xlu0 0
    %771 = vperm.xlu0 %770, %v665
    %v772 = vpop.permute.xlu0 %771
    %775 = vset.pattern.permute.xlu0 0
    %776 = vperm.xlu0 %775, %v666
    %v777 = vpop.permute.xlu0 %776
    %780 = vset.pattern.permute.xlu0 0
    %781 = vperm.xlu0 %780, %v667
    %v782 = vpop.permute.xlu0 %781
    %785 = vset.pattern.permute.xlu0 0
    %786 = vperm.xlu0 %785, %v668
    %v787 = vpop.permute.xlu0 %786
    %790 = vset.pattern.permute.xlu0 0
    %791 = vperm.xlu0 %790, %v669
    %v792 = vpop.permute.xlu0 %791
    %795 = vset.pattern.permute.xlu0 0
    %796 = vperm.xlu0 %795, %v670
    %v797 = vpop.permute.xlu0 %796
    %v799 = vsub.f32 %v591, %v722
    %v800 = vsub.f32 %v592, %v727
    %v801 = vsub.f32 %v593, %v732
    %v802 = vsub.f32 %v594, %v737
    %v803 = vsub.f32 %v595, %v742
    %v804 = vsub.f32 %v596, %v747
    %v805 = vsub.f32 %v597, %v752
    %v806 = vsub.f32 %v598, %v757
    %v807 = vsub.f32 %v599, %v762
    %v808 = vsub.f32 %v600, %v767
    %v809 = vsub.f32 %v601, %v772
    %v810 = vsub.f32 %v602, %v777
    %v811 = vsub.f32 %v603, %v782
    %v812 = vsub.f32 %v604, %v787
    %v813 = vsub.f32 %v605, %v792
    %v814 = vsub.f32 %v606, %v797
    %v815 = vmul.f32 %v799, 1.442695
    %v816 = vpow.pop %v815
    %v817 = vmul.f32 %v800, 1.442695
    %v818 = vpow.pop %v817
    %v819 = vmul.f32 %v801, 1.442695
    %v820 = vpow.pop %v819
    %v821 = vmul.f32 %v802, 1.442695
    %v822 = vpow.pop %v821
    %v823 = vmul.f32 %v803, 1.442695
    %v824 = vpow.pop %v823
    %v825 = vmul.f32 %v804, 1.442695
    %v826 = vpow.pop %v825
    %v827 = vmul.f32 %v805, 1.442695
    %v828 = vpow.pop %v827
    %v829 = vmul.f32 %v806, 1.442695
    %v830 = vpow.pop %v829
    %v831 = vmul.f32 %v807, 1.442695
    %v832 = vpow.pop %v831
    %v833 = vmul.f32 %v808, 1.442695
    %v834 = vpow.pop %v833
    %v835 = vmul.f32 %v809, 1.442695
    %v836 = vpow.pop %v835
    %v837 = vmul.f32 %v810, 1.442695
    %v838 = vpow.pop %v837
    %v839 = vmul.f32 %v811, 1.442695
    %v840 = vpow.pop %v839
    %v841 = vmul.f32 %v812, 1.442695
    %v842 = vpow.pop %v841
    %v843 = vmul.f32 %v813, 1.442695
    %v844 = vpow.pop %v843
    %v845 = vmul.f32 %v814, 1.442695
    %v846 = vpow.pop %v845
    %v847 = vld [vmem:[#allocation4] sm:$0xff]
    %v848 = vld [vmem:[#allocation4 + $0x8] sm:$0xff]
    %v849 = vld [vmem:[#allocation4 + $0x10] sm:$0xff]
    %v850 = vld [vmem:[#allocation4 + $0x18] sm:$0xff]
    %v851 = vld [vmem:[#allocation4 + $0x20] sm:$0xff]
    %v852 = vld [vmem:[#allocation4 + $0x28] sm:$0xff]
    %v853 = vld [vmem:[#allocation4 + $0x30] sm:$0xff]
    %v854 = vld [vmem:[#allocation4 + $0x38] sm:$0xff]
    %v855 = vld [vmem:[#allocation4 + $0x40] sm:$0xff]
    %v856 = vld [vmem:[#allocation4 + $0x48] sm:$0xff]
    %v857 = vld [vmem:[#allocation4 + $0x50] sm:$0xff]
    %v858 = vld [vmem:[#allocation4 + $0x58] sm:$0xff]
    %v859 = vld [vmem:[#allocation4 + $0x60] sm:$0xff]
    %v860 = vld [vmem:[#allocation4 + $0x68] sm:$0xff]
    %v861 = vld [vmem:[#allocation4 + $0x70] sm:$0xff]
    %v862 = vld [vmem:[#allocation4 + $0x78] sm:$0xff]
    %v863 = vmul.f32 %v688, %v847
    %v864 = vmul.f32 %v690, %v848
    %v865 = vmul.f32 %v692, %v849
    %v866 = vmul.f32 %v694, %v850
    %v867 = vmul.f32 %v696, %v851
    %v868 = vmul.f32 %v698, %v852
    %v869 = vmul.f32 %v700, %v853
    %v870 = vmul.f32 %v702, %v854
    %v871 = vmul.f32 %v704, %v855
    %v872 = vmul.f32 %v706, %v856
    %v873 = vmul.f32 %v708, %v857
    %v874 = vmul.f32 %v710, %v858
    %v875 = vmul.f32 %v712, %v859
    %v876 = vmul.f32 %v714, %v860
    %v877 = vmul.f32 %v716, %v861
    %v878 = vmul.f32 %v718, %v862
    %879 = vadd.xlane.f32.xlu0 %v816
    %v880 = vpop.xlane.xlu0 %879
    %881 = vadd.xlane.f32.xlu0 %v818
    %v882 = vpop.xlane.xlu0 %881
    %883 = vadd.xlane.f32.xlu0 %v820
    %v884 = vpop.xlane.xlu0 %883
    %885 = vadd.xlane.f32.xlu0 %v822
    %v886 = vpop.xlane.xlu0 %885
    %887 = vadd.xlane.f32.xlu0 %v824
    %v888 = vpop.xlane.xlu0 %887
    %889 = vadd.xlane.f32.xlu0 %v826
    %v890 = vpop.xlane.xlu0 %889
    %891 = vadd.xlane.f32.xlu0 %v828
    %v892 = vpop.xlane.xlu0 %891
    %893 = vadd.xlane.f32.xlu0 %v830
    %v894 = vpop.xlane.xlu0 %893
    %895 = vadd.xlane.f32.xlu0 %v832
    %v896 = vpop.xlane.xlu0 %895
    %897 = vadd.xlane.f32.xlu0 %v834
    %v898 = vpop.xlane.xlu0 %897
    %899 = vadd.xlane.f32.xlu0 %v836
    %v900 = vpop.xlane.xlu0 %899
    %901 = vadd.xlane.f32.xlu0 %v838
    %v902 = vpop.xlane.xlu0 %901
    %903 = vadd.xlane.f32.xlu0 %v840
    %v904 = vpop.xlane.xlu0 %903
    %905 = vadd.xlane.f32.xlu0 %v842
    %v906 = vpop.xlane.xlu0 %905
    %907 = vadd.xlane.f32.xlu0 %v844
    %v908 = vpop.xlane.xlu0 %907
    %909 = vadd.xlane.f32.xlu0 %v846
    %v910 = vpop.xlane.xlu0 %909
    %v911 = vadd.f32 %v863, %v880
    %v912 = vadd.f32 %v864, %v882
    %v913 = vadd.f32 %v865, %v884
    %v914 = vadd.f32 %v866, %v886
    %v915 = vadd.f32 %v867, %v888
    %v916 = vadd.f32 %v868, %v890
    %v917 = vadd.f32 %v869, %v892
    %v918 = vadd.f32 %v870, %v894
    %v919 = vadd.f32 %v871, %v896
    %v920 = vadd.f32 %v872, %v898
    %v921 = vadd.f32 %v873, %v900
    %v922 = vadd.f32 %v874, %v902
    %v923 = vadd.f32 %v875, %v904
    %v924 = vadd.f32 %v876, %v906
    %v925 = vadd.f32 %v877, %v908
    %v926 = vadd.f32 %v878, %v910
    %vm927 = vcmask 7168
    %928 = vst.msk [vmem:[#allocation4] sm:$0xff] %vm927, %v911
    %929 = vst.msk [vmem:[#allocation4 + $0x8] sm:$0xff] %vm927, %v912
    %930 = vst.msk [vmem:[#allocation4 + $0x10] sm:$0xff] %vm927, %v913
    %931 = vst.msk [vmem:[#allocation4 + $0x18] sm:$0xff] %vm927, %v914
    %932 = vst.msk [vmem:[#allocation4 + $0x20] sm:$0xff] %vm927, %v915
    %933 = vst.msk [vmem:[#allocation4 + $0x28] sm:$0xff] %vm927, %v916
    %934 = vst.msk [vmem:[#allocation4 + $0x30] sm:$0xff] %vm927, %v917
    %935 = vst.msk [vmem:[#allocation4 + $0x38] sm:$0xff] %vm927, %v918
    %936 = vst.msk [vmem:[#allocation4 + $0x40] sm:$0xff] %vm927, %v919
    %937 = vst.msk [vmem:[#allocation4 + $0x48] sm:$0xff] %vm927, %v920
    %938 = vst.msk [vmem:[#allocation4 + $0x50] sm:$0xff] %vm927, %v921
    %939 = vst.msk [vmem:[#allocation4 + $0x58] sm:$0xff] %vm927, %v922
    %940 = vst.msk [vmem:[#allocation4 + $0x60] sm:$0xff] %vm927, %v923
    %941 = vst.msk [vmem:[#allocation4 + $0x68] sm:$0xff] %vm927, %v924
    %942 = vst.msk [vmem:[#allocation4 + $0x70] sm:$0xff] %vm927, %v925
    %943 = vst.msk [vmem:[#allocation4 + $0x78] sm:$0xff] %vm927, %v926
    %v944 = vpack.c.bf16 %v818, %v816
    %v945 = vpack.c.bf16 %v822, %v820
    %v946 = vpack.c.bf16 %v826, %v824
    %v947 = vpack.c.bf16 %v830, %v828
    %v948 = vpack.c.bf16 %v834, %v832
    %v949 = vpack.c.bf16 %v838, %v836
    %v950 = vpack.c.bf16 %v842, %v840
    %v951 = vpack.c.bf16 %v846, %v844
    %952 = vmatprep.subr.bf16.mxu0 0
    %953 = vmatpush1.bf16.xpose.msra.mxu0 %v456
    %954 = vmatprep.subr.bf16.mxu0 0
    %955 = vmatpush1.bf16.xpose.msra.mxu0 %v457
    %956 = vmatprep.subr.bf16.mxu0 0
    %957 = vmatpush1.bf16.xpose.msra.mxu0 %v458
    %958 = vmatprep.subr.bf16.mxu0 0
    %959 = vmatpush1.bf16.xpose.msra.mxu0 %v459
    %960 = vmatprep.subr.bf16.mxu0 0
    %961 = vmatpush1.bf16.xpose.msra.mxu0 %v460
    %962 = vmatprep.subr.bf16.mxu0 0
    %963 = vmatpush1.bf16.xpose.msra.mxu0 %v461
    %964 = vmatprep.subr.bf16.mxu0 0
    %965 = vmatpush1.bf16.xpose.msra.mxu0 %v462
    %966 = vmatprep.subr.bf16.mxu0 0
    %967 = vmatpush1.bf16.xpose.msra.mxu0 %v463
    %968 = vmatprep.subr.bf16.mxu0 0
    %969 = vmatpush1.bf16.xpose.msra.mxu0 0
    %970 = vmatprep.subr.bf16.mxu0 0
    %971 = vmatpush1.bf16.xpose.msra.mxu0 0
    %972 = vmatprep.subr.bf16.mxu0 0
    %973 = vmatpush1.bf16.xpose.msra.mxu0 0
    %974 = vmatprep.subr.bf16.mxu0 0
    %975 = vmatpush1.bf16.xpose.msra.mxu0 0
    %976 = vmatprep.subr.bf16.mxu0 0
    %977 = vmatpush1.bf16.xpose.msra.mxu0 0
    %978 = vmatprep.subr.bf16.mxu0 0
    %979 = vmatpush1.bf16.xpose.msra.mxu0 0
    %980 = vmatprep.subr.bf16.mxu0 0
    %981 = vmatpush1.bf16.xpose.msra.mxu0 0
    %982 = vmatprep.subr.bf16.mxu0 0
    %983 = vmatpush1.bf16.xpose.msra.mxu0 0
    %984 = vmatprep.mubr.bf16.mxu0 0
    %985 = vmatmul.mubr.bf16.gmra.mrb[0].mxu0 %v944
    %v986 = vpop.f32.mrb[0].mxu0
    %v987 = vadd.f32 0.0, %v986
    %v988 = vpop.f32.mrb[0].mxu0
    %v989 = vpop.f32.mrb[0].mxu0
    %v990 = vadd.f32 0.0, %v989
    %v991 = vpop.f32.mrb[0].mxu0
    %992 = vmatprep.mubr.bf16.mxu0 0
    %993 = vmatmul.mubr.bf16.gmra.mrb[0].mxu0 %v945
    %v994 = vpop.f32.mrb[0].mxu0
    %v995 = vadd.f32 0.0, %v994
    %v996 = vpop.f32.mrb[0].mxu0
    %v997 = vpop.f32.mrb[0].mxu0
    %v998 = vadd.f32 0.0, %v997
    %v999 = vpop.f32.mrb[0].mxu0
    %1000 = vmatprep.mubr.bf16.mxu0 0
    %1001 = vmatmul.mubr.bf16.gmra.mrb[0].mxu0 %v946
    %v1002 = vpop.f32.mrb[0].mxu0
    %v1003 = vadd.f32 0.0, %v1002
    %v1004 = vpop.f32.mrb[0].mxu0
    %v1005 = vpop.f32.mrb[0].mxu0
    %v1006 = vadd.f32 0.0, %v1005
    %v1007 = vpop.f32.mrb[0].mxu0
    %1008 = vmatprep.mubr.bf16.mxu0 0
    %1009 = vmatmul.mubr.bf16.gmra.mrb[0].mxu0 %v947
    %v1010 = vpop.f32.mrb[0].mxu0
    %v1011 = vadd.f32 0.0, %v1010
    %v1012 = vpop.f32.mrb[0].mxu0
    %v1013 = vpop.f32.mrb[0].mxu0
    %v1014 = vadd.f32 0.0, %v1013
    %v1015 = vpop.f32.mrb[0].mxu0
    %1016 = vmatprep.mubr.bf16.mxu0 0
    %1017 = vmatmul.mubr.bf16.gmra.mrb[0].mxu0 %v948
    %v1018 = vpop.f32.mrb[0].mxu0
    %v1019 = vadd.f32 0.0, %v1018
    %v1020 = vpop.f32.mrb[0].mxu0
    %v1021 = vpop.f32.mrb[0].mxu0
    %v1022 = vadd.f32 0.0, %v1021
    %v1023 = vpop.f32.mrb[0].mxu0
    %1024 = vmatprep.mubr.bf16.mxu0 0
    %1025 = vmatmul.mubr.bf16.gmra.mrb[0].mxu0 %v949
    %v1026 = vpop.f32.mrb[0].mxu0
    %v1027 = vadd.f32 0.0, %v1026
    %v1028 = vpop.f32.mrb[0].mxu0
    %v1029 = vpop.f32.mrb[0].mxu0
    %v1030 = vadd.f32 0.0, %v1029
    %v1031 = vpop.f32.mrb[0].mxu0
    %1032 = vmatprep.mubr.bf16.mxu0 0
    %1033 = vmatmul.mubr.bf16.gmra.mrb[0].mxu0 %v950
    %v1034 = vpop.f32.mrb[0].mxu0
    %v1035 = vadd.f32 0.0, %v1034
    %v1036 = vpop.f32.mrb[0].mxu0
    %v1037 = vpop.f32.mrb[0].mxu0
    %v1038 = vadd.f32 0.0, %v1037
    %v1039 = vpop.f32.mrb[0].mxu0
    %1040 = vmatprep.mubr.bf16.mxu0 0
    %1041 = vmatmul.mubr.bf16.gmra.mrb[0].mxu0 %v951
    %v1042 = vpop.f32.mrb[0].mxu0
    %v1043 = vadd.f32 0.0, %v1042
    %v1044 = vpop.f32.mrb[0].mxu0
    %v1045 = vpop.f32.mrb[0].mxu0
    %v1046 = vadd.f32 0.0, %v1045
    %v1047 = vpop.f32.mrb[0].mxu0
    %1048 = vdwg.mxu0
    %v1049 = vld [vmem:[#allocation5] sm:$0xff]
    %v1050 = vld [vmem:[#allocation5 + $0x8] sm:$0xff]
    %v1051 = vld [vmem:[#allocation5 + $0x10] sm:$0xff]
    %v1052 = vld [vmem:[#allocation5 + $0x18] sm:$0xff]
    %v1053 = vld [vmem:[#allocation5 + $0x20] sm:$0xff]
    %v1054 = vld [vmem:[#allocation5 + $0x28] sm:$0xff]
    %v1055 = vld [vmem:[#allocation5 + $0x30] sm:$0xff]
    %v1056 = vld [vmem:[#allocation5 + $0x38] sm:$0xff]
    %v1057 = vld [vmem:[#allocation5 + $0x40] sm:$0xff]
    %v1058 = vld [vmem:[#allocation5 + $0x48] sm:$0xff]
    %v1059 = vld [vmem:[#allocation5 + $0x50] sm:$0xff]
    %v1060 = vld [vmem:[#allocation5 + $0x58] sm:$0xff]
    %v1061 = vld [vmem:[#allocation5 + $0x60] sm:$0xff]
    %v1062 = vld [vmem:[#allocation5 + $0x68] sm:$0xff]
    %v1063 = vld [vmem:[#allocation5 + $0x70] sm:$0xff]
    %v1064 = vld [vmem:[#allocation5 + $0x78] sm:$0xff]
    %1066 = vset.pattern.permute.xlu0 0
    %1067 = vperm.xlu0 %1066, %v688
    %v1068 = vpop.permute.xlu0 %1067
    %1071 = vset.pattern.permute.xlu0 0
    %1072 = vperm.xlu0 %1071, %v690
    %v1073 = vpop.permute.xlu0 %1072
    %1076 = vset.pattern.permute.xlu0 0
    %1077 = vperm.xlu0 %1076, %v692
    %v1078 = vpop.permute.xlu0 %1077
    %1081 = vset.pattern.permute.xlu0 0
    %1082 = vperm.xlu0 %1081, %v694
    %v1083 = vpop.permute.xlu0 %1082
    %1086 = vset.pattern.permute.xlu0 0
    %1087 = vperm.xlu0 %1086, %v696
    %v1088 = vpop.permute.xlu0 %1087
    %1091 = vset.pattern.permute.xlu0 0
    %1092 = vperm.xlu0 %1091, %v698
    %v1093 = vpop.permute.xlu0 %1092
    %1096 = vset.pattern.permute.xlu0 0
    %1097 = vperm.xlu0 %1096, %v700
    %v1098 = vpop.permute.xlu0 %1097
    %1101 = vset.pattern.permute.xlu0 0
    %1102 = vperm.xlu0 %1101, %v702
    %v1103 = vpop.permute.xlu0 %1102
    %1106 = vset.pattern.permute.xlu0 0
    %1107 = vperm.xlu0 %1106, %v704
    %v1108 = vpop.permute.xlu0 %1107
    %1111 = vset.pattern.permute.xlu0 0
    %1112 = vperm.xlu0 %1111, %v706
    %v1113 = vpop.permute.xlu0 %1112
    %1116 = vset.pattern.permute.xlu0 0
    %1117 = vperm.xlu0 %1116, %v708
    %v1118 = vpop.permute.xlu0 %1117
    %1121 = vset.pattern.permute.xlu0 0
    %1122 = vperm.xlu0 %1121, %v710
    %v1123 = vpop.permute.xlu0 %1122
    %1126 = vset.pattern.permute.xlu0 0
    %1127 = vperm.xlu0 %1126, %v712
    %v1128 = vpop.permute.xlu0 %1127
    %1131 = vset.pattern.permute.xlu0 0
    %1132 = vperm.xlu0 %1131, %v714
    %v1133 = vpop.permute.xlu0 %1132
    %1136 = vset.pattern.permute.xlu0 0
    %1137 = vperm.xlu0 %1136, %v716
    %v1138 = vpop.permute.xlu0 %1137
    %1141 = vset.pattern.permute.xlu0 0
    %1142 = vperm.xlu0 %1141, %v718
    %v1143 = vpop.permute.xlu0 %1142
    %v1145 = vmul.f32 %v1068, %v1049
    %v1146 = vmul.f32 %v1073, %v1050
    %v1147 = vmul.f32 %v1078, %v1051
    %v1148 = vmul.f32 %v1083, %v1052
    %v1149 = vmul.f32 %v1088, %v1053
    %v1150 = vmul.f32 %v1093, %v1054
    %v1151 = vmul.f32 %v1098, %v1055
    %v1152 = vmul.f32 %v1103, %v1056
    %v1153 = vmul.f32 %v1108, %v1057
    %v1154 = vmul.f32 %v1113, %v1058
    %v1155 = vmul.f32 %v1118, %v1059
    %v1156 = vmul.f32 %v1123, %v1060
    %v1157 = vmul.f32 %v1128, %v1061
    %v1158 = vmul.f32 %v1133, %v1062
    %v1159 = vmul.f32 %v1138, %v1063
    %v1160 = vmul.f32 %v1143, %v1064
    %v1161 = vadd.f32 %v1145, %v987
    %v1162 = vadd.f32 %v1146, %v990
    %v1163 = vadd.f32 %v1147, %v995
    %v1164 = vadd.f32 %v1148, %v998
    %v1165 = vadd.f32 %v1149, %v1003
    %v1166 = vadd.f32 %v1150, %v1006
    %v1167 = vadd.f32 %v1151, %v1011
    %v1168 = vadd.f32 %v1152, %v1014
    %v1169 = vadd.f32 %v1153, %v1019
    %v1170 = vadd.f32 %v1154, %v1022
    %v1171 = vadd.f32 %v1155, %v1027
    %v1172 = vadd.f32 %v1156, %v1030
    %v1173 = vadd.f32 %v1157, %v1035
    %v1174 = vadd.f32 %v1158, %v1038
    %v1175 = vadd.f32 %v1159, %v1043
    %v1176 = vadd.f32 %v1160, %v1046
    %1177 = vst [vmem:[#allocation5] sm:$0xff] %v1161
    %1178 = vst [vmem:[#allocation5 + $0x8] sm:$0xff] %v1162
    %1179 = vst [vmem:[#allocation5 + $0x10] sm:$0xff] %v1163
    %1180 = vst [vmem:[#allocation5 + $0x18] sm:$0xff] %v1164
    %1181 = vst [vmem:[#allocation5 + $0x20] sm:$0xff] %v1165
    %1182 = vst [vmem:[#allocation5 + $0x28] sm:$0xff] %v1166
    %1183 = vst [vmem:[#allocation5 + $0x30] sm:$0xff] %v1167
    %1184 = vst [vmem:[#allocation5 + $0x38] sm:$0xff] %v1168
    %1185 = vst [vmem:[#allocation5 + $0x40] sm:$0xff] %v1169
    %1186 = vst [vmem:[#allocation5 + $0x48] sm:$0xff] %v1170
    %1187 = vst [vmem:[#allocation5 + $0x50] sm:$0xff] %v1171
    %1188 = vst [vmem:[#allocation5 + $0x58] sm:$0xff] %v1172
    %1189 = vst [vmem:[#allocation5 + $0x60] sm:$0xff] %v1173
    %1190 = vst [vmem:[#allocation5 + $0x68] sm:$0xff] %v1174
    %1191 = vst [vmem:[#allocation5 + $0x70] sm:$0xff] %v1175
    %1192 = vst [vmem:[#allocation5 + $0x78] sm:$0xff] %v1176
    %1193 = vst.msk [vmem:[#allocation3] sm:$0xff] %vm927, %v655
    %1194 = vst.msk [vmem:[#allocation3 + $0x8] sm:$0xff] %vm927, %v656
    %1195 = vst.msk [vmem:[#allocation3 + $0x10] sm:$0xff] %vm927, %v657
    %1196 = vst.msk [vmem:[#allocation3 + $0x18] sm:$0xff] %vm927, %v658
    %1197 = vst.msk [vmem:[#allocation3 + $0x20] sm:$0xff] %vm927, %v659
    %1198 = vst.msk [vmem:[#allocation3 + $0x28] sm:$0xff] %vm927, %v660
    %1199 = vst.msk [vmem:[#allocation3 + $0x30] sm:$0xff] %vm927, %v661
    %1200 = vst.msk [vmem:[#allocation3 + $0x38] sm:$0xff] %vm927, %v662
    %1201 = vst.msk [vmem:[#allocation3 + $0x40] sm:$0xff] %vm927, %v663
    %1202 = vst.msk [vmem:[#allocation3 + $0x48] sm:$0xff] %vm927, %v664
    %1203 = vst.msk [vmem:[#allocation3 + $0x50] sm:$0xff] %vm927, %v665
    %1204 = vst.msk [vmem:[#allocation3 + $0x58] sm:$0xff] %vm927, %v666
    %1205 = vst.msk [vmem:[#allocation3 + $0x60] sm:$0xff] %vm927, %v667
    %1206 = vst.msk [vmem:[#allocation3 + $0x68] sm:$0xff] %vm927, %v668
    %1207 = vst.msk [vmem:[#allocation3 + $0x70] sm:$0xff] %vm927, %v669
    %1208 = vst.msk [vmem:[#allocation3 + $0x78] sm:$0xff] %vm927, %v670
    // Predicated region
    $region46: #{tpu_custom_call.1} parent=1 // pred_check
      %p1209 = pneg %p83
    $region47: #{tpu_custom_call.1} parent=1 // pred_check_branch
      %1211 = sbr.rel (%p1209) target = $region49
    $region48: #{tpu_custom_call.1} parent=1 // pred_region
      %v1212 = vld [vmem:[#allocation5] sm:$0xff]
      %v1213 = vld [vmem:[#allocation5 + $0x8] sm:$0xff]
      %v1214 = vld [vmem:[#allocation5 + $0x10] sm:$0xff]
      %v1215 = vld [vmem:[#allocation5 + $0x18] sm:$0xff]
      %v1216 = vld [vmem:[#allocation5 + $0x20] sm:$0xff]
      %v1217 = vld [vmem:[#allocation5 + $0x28] sm:$0xff]
      %v1218 = vld [vmem:[#allocation5 + $0x30] sm:$0xff]
      %v1219 = vld [vmem:[#allocation5 + $0x38] sm:$0xff]
      %v1220 = vld [vmem:[#allocation5 + $0x40] sm:$0xff]
      %v1221 = vld [vmem:[#allocation5 + $0x48] sm:$0xff]
      %v1222 = vld [vmem:[#allocation5 + $0x50] sm:$0xff]
      %v1223 = vld [vmem:[#allocation5 + $0x58] sm:$0xff]
      %v1224 = vld [vmem:[#allocation5 + $0x60] sm:$0xff]
      %v1225 = vld [vmem:[#allocation5 + $0x68] sm:$0xff]
      %v1226 = vld [vmem:[#allocation5 + $0x70] sm:$0xff]
      %v1227 = vld [vmem:[#allocation5 + $0x78] sm:$0xff]
      %v1228 = vld [vmem:[#allocation4] sm:$0xff]
      %v1229 = vld [vmem:[#allocation4 + $0x8] sm:$0xff]
      %v1230 = vld [vmem:[#allocation4 + $0x10] sm:$0xff]
      %v1231 = vld [vmem:[#allocation4 + $0x18] sm:$0xff]
      %v1232 = vld [vmem:[#allocation4 + $0x20] sm:$0xff]
      %v1233 = vld [vmem:[#allocation4 + $0x28] sm:$0xff]
      %v1234 = vld [vmem:[#allocation4 + $0x30] sm:$0xff]
      %v1235 = vld [vmem:[#allocation4 + $0x38] sm:$0xff]
      %v1236 = vld [vmem:[#allocation4 + $0x40] sm:$0xff]
      %v1237 = vld [vmem:[#allocation4 + $0x48] sm:$0xff]
      %v1238 = vld [vmem:[#allocation4 + $0x50] sm:$0xff]
      %v1239 = vld [vmem:[#allocation4 + $0x58] sm:$0xff]
      %v1240 = vld [vmem:[#allocation4 + $0x60] sm:$0xff]
      %v1241 = vld [vmem:[#allocation4 + $0x68] sm:$0xff]
      %v1242 = vld [vmem:[#allocation4 + $0x70] sm:$0xff]
      %v1243 = vld [vmem:[#allocation4 + $0x78] sm:$0xff]
      %v1244 = vrcp.pop %v1228
      %v1245 = vrcp.pop %v1229
      %v1246 = vrcp.pop %v1230
      %v1247 = vrcp.pop %v1231
      %v1248 = vrcp.pop %v1232
      %v1249 = vrcp.pop %v1233
      %v1250 = vrcp.pop %v1234
      %v1251 = vrcp.pop %v1235
      %v1252 = vrcp.pop %v1236
      %v1253 = vrcp.pop %v1237
      %v1254 = vrcp.pop %v1238
      %v1255 = vrcp.pop %v1239
      %v1256 = vrcp.pop %v1240
      %v1257 = vrcp.pop %v1241
      %v1258 = vrcp.pop %v1242
      %v1259 = vrcp.pop %v1243
      %1261 = vset.pattern.permute.xlu0 0
      %1262 = vperm.xlu0 %1261, %v1244
      %v1263 = vpop.permute.xlu0 %1262
      %1266 = vset.pattern.permute.xlu0 0
      %1267 = vperm.xlu0 %1266, %v1245
      %v1268 = vpop.permute.xlu0 %1267
      %1271 = vset.pattern.permute.xlu0 0
      %1272 = vperm.xlu0 %1271, %v1246
      %v1273 = vpop.permute.xlu0 %1272
      %1276 = vset.pattern.permute.xlu0 0
      %1277 = vperm.xlu0 %1276, %v1247
      %v1278 = vpop.permute.xlu0 %1277
      %1281 = vset.pattern.permute.xlu0 0
      %1282 = vperm.xlu0 %1281, %v1248
      %v1283 = vpop.permute.xlu0 %1282
      %1286 = vset.pattern.permute.xlu0 0
      %1287 = vperm.xlu0 %1286, %v1249
      %v1288 = vpop.permute.xlu0 %1287
      %1291 = vset.pattern.permute.xlu0 0
      %1292 = vperm.xlu0 %1291, %v1250
      %v1293 = vpop.permute.xlu0 %1292
      %1296 = vset.pattern.permute.xlu0 0
      %1297 = vperm.xlu0 %1296, %v1251
      %v1298 = vpop.permute.xlu0 %1297
      %1301 = vset.pattern.permute.xlu0 0
      %1302 = vperm.xlu0 %1301, %v1252
      %v1303 = vpop.permute.xlu0 %1302
      %1306 = vset.pattern.permute.xlu0 0
      %1307 = vperm.xlu0 %1306, %v1253
      %v1308 = vpop.permute.xlu0 %1307
      %1311 = vset.pattern.permute.xlu0 0
      %1312 = vperm.xlu0 %1311, %v1254
      %v1313 = vpop.permute.xlu0 %1312
      %1316 = vset.pattern.permute.xlu0 0
      %1317 = vperm.xlu0 %1316, %v1255
      %v1318 = vpop.permute.xlu0 %1317
      %1321 = vset.pattern.permute.xlu0 0
      %1322 = vperm.xlu0 %1321, %v1256
      %v1323 = vpop.permute.xlu0 %1322
      %1326 = vset.pattern.permute.xlu0 0
      %1327 = vperm.xlu0 %1326, %v1257
      %v1328 = vpop.permute.xlu0 %1327
      %1331 = vset.pattern.permute.xlu0 0
      %1332 = vperm.xlu0 %1331, %v1258
      %v1333 = vpop.permute.xlu0 %1332
      %1336 = vset.pattern.permute.xlu0 0
      %1337 = vperm.xlu0 %1336, %v1259
      %v1338 = vpop.permute.xlu0 %1337
      %v1340 = vmul.f32 %v1212, %v1263
      %v1341 = vmul.f32 %v1213, %v1268
      %v1342 = vmul.f32 %v1214, %v1273
      %v1343 = vmul.f32 %v1215, %v1278
      %v1344 = vmul.f32 %v1216, %v1283
      %v1345 = vmul.f32 %v1217, %v1288
      %v1346 = vmul.f32 %v1218, %v1293
      %v1347 = vmul.f32 %v1219, %v1298
      %v1348 = vmul.f32 %v1220, %v1303
      %v1349 = vmul.f32 %v1221, %v1308
      %v1350 = vmul.f32 %v1222, %v1313
      %v1351 = vmul.f32 %v1223, %v1318
      %v1352 = vmul.f32 %v1224, %v1323
      %v1353 = vmul.f32 %v1225, %v1328
      %v1354 = vmul.f32 %v1226, %v1333
      %v1355 = vmul.f32 %v1227, %v1338
      %v1356 = vpack.c.bf16 %v1341, %v1340
      %v1357 = vpack.c.bf16 %v1343, %v1342
      %v1358 = vpack.c.bf16 %v1345, %v1344
      %v1359 = vpack.c.bf16 %v1347, %v1346
      %v1360 = vpack.c.bf16 %v1349, %v1348
      %v1361 = vpack.c.bf16 %v1351, %v1350
      %v1362 = vpack.c.bf16 %v1353, %v1352
      %v1363 = vpack.c.bf16 %v1355, %v1354
      %v1364 = vld [vmem:[#allocation12] sm:$0xf]
      %v1365 = vld [vmem:[#allocation12 + $0x4] sm:$0xf]
      %v1366 = vld [vmem:[#allocation12 + $0x8] sm:$0xf]
      %v1367 = vld [vmem:[#allocation12 + $0xc] sm:$0xf]
      %v1368 = vld [vmem:[#allocation12 + $0x10] sm:$0xf]
      %v1369 = vld [vmem:[#allocation12 + $0x14] sm:$0xf]
      %v1370 = vld [vmem:[#allocation12 + $0x18] sm:$0xf]
      %v1371 = vld [vmem:[#allocation12 + $0x1c] sm:$0xf]
      %v1372 = vld [vmem:[#allocation12 + $0x20] sm:$0xf]
      %v1373 = vld [vmem:[#allocation12 + $0x24] sm:$0xf]
      %v1374 = vld [vmem:[#allocation12 + $0x28] sm:$0xf]
      %v1375 = vld [vmem:[#allocation12 + $0x2c] sm:$0xf]
      %v1376 = vld [vmem:[#allocation12 + $0x30] sm:$0xf]
      %v1377 = vld [vmem:[#allocation12 + $0x34] sm:$0xf]
      %v1378 = vld [vmem:[#allocation12 + $0x38] sm:$0xf]
      %v1379 = vld [vmem:[#allocation12 + $0x3c] sm:$0xf]
      %v1380 = vld [vmem:[%s5] sm:$0x1]
      %v1382 = vlaneseq
      %v1383 = vshrl.u32 %v1382, 7
      %v1384 = vsub.s32 0, %v1383
      %v1385 = vrot.slane %v1380, %v1384
      %v1403 = vunpack.c.l.b16 %v1364
      %v1404 = vunpack.c.l.b16 %v1365
      %v1405 = vunpack.c.l.b16 %v1366
      %v1406 = vunpack.c.l.b16 %v1367
      %v1407 = vunpack.c.l.b16 %v1368
      %v1408 = vunpack.c.l.b16 %v1369
      %v1409 = vunpack.c.l.b16 %v1370
      %v1410 = vunpack.c.l.b16 %v1371
      %v1411 = vunpack.c.l.b16 %v1372
      %v1412 = vunpack.c.l.b16 %v1373
      %v1413 = vunpack.c.l.b16 %v1374
      %v1414 = vunpack.c.l.b16 %v1375
      %v1415 = vunpack.c.l.b16 %v1376
      %v1416 = vunpack.c.l.b16 %v1377
      %v1417 = vunpack.c.l.b16 %v1378
      %v1418 = vunpack.c.l.b16 %v1379
      %v1419 = vpack.c.b16 %v1404, %v1403
      %v1420 = vpack.c.b16 %v1406, %v1405
      %v1421 = vpack.c.b16 %v1408, %v1407
      %v1422 = vpack.c.b16 %v1410, %v1409
      %v1423 = vpack.c.b16 %v1412, %v1411
      %v1424 = vpack.c.b16 %v1414, %v1413
      %v1425 = vpack.c.b16 %v1416, %v1415
      %v1426 = vpack.c.b16 %v1418, %v1417
      %1435 = vmatprep.subr.bf16.mxu0 0
      %1436 = vmatpush1.bf16.msra.mxu0 %v1419
      %1437 = vmatprep.subr.bf16.mxu0 0
      %1438 = vmatpush1.bf16.msra.mxu0 %v1420
      %1439 = vmatprep.subr.bf16.mxu0 0
      %1440 = vmatpush1.bf16.msra.mxu0 %v1421
      %1441 = vmatprep.subr.bf16.mxu0 0
      %1442 = vmatpush1.bf16.msra.mxu0 %v1422
      %1443 = vmatprep.subr.bf16.mxu0 0
      %1444 = vmatpush1.bf16.msra.mxu0 %v1423
      %1445 = vmatprep.subr.bf16.mxu0 0
      %1446 = vmatpush1.bf16.msra.mxu0 %v1424
      %1447 = vmatprep.subr.bf16.mxu0 0
      %1448 = vmatpush1.bf16.msra.mxu0 %v1425
      %1449 = vmatprep.subr.bf16.mxu0 0
      %1450 = vmatpush1.bf16.msra.mxu0 %v1426
      %1451 = vmatprep.subr.bf16.mxu0 0
      %1452 = vmatpush1.bf16.msra.mxu0 0
      %1453 = vmatprep.subr.bf16.mxu0 0
      %1454 = vmatpush1.bf16.msra.mxu0 0
      %1455 = vmatprep.subr.bf16.mxu0 0
      %1456 = vmatpush1.bf16.msra.mxu0 0
      %1457 = vmatprep.subr.bf16.mxu0 0
      %1458 = vmatpush1.bf16.msra.mxu0 0
      %1459 = vmatprep.subr.bf16.mxu0 0
      %1460 = vmatpush1.bf16.msra.mxu0 0
      %1461 = vmatprep.subr.bf16.mxu0 0
      %1462 = vmatpush1.bf16.msra.mxu0 0
      %1463 = vmatprep.subr.bf16.mxu0 0
      %1464 = vmatpush1.bf16.msra.mxu0 0
      %1465 = vmatprep.subr.bf16.mxu0 0
      %1466 = vmatpush1.bf16.msra.mxu0 0
      %1467 = vmatprep.mubr.bf16.mxu0 0
      %1468 = vmatmul.mubr.bf16.gmra.mrb[0].mxu0 %v1356
      %v1469 = vpop.f32.mrb[0].mxu0
      %v1470 = vadd.f32 %v1385, %v1469
      %v1471 = vpop.f32.mrb[0].mxu0
      %v1472 = vpop.f32.mrb[0].mxu0
      %v1473 = vadd.f32 %v1385, %v1472
      %v1474 = vpop.f32.mrb[0].mxu0
      %1475 = vmatprep.mubr.bf16.mxu0 0
      %1476 = vmatmul.mubr.bf16.gmra.mrb[0].mxu0 %v1357
      %v1477 = vpop.f32.mrb[0].mxu0
      %v1478 = vadd.f32 %v1385, %v1477
      %v1479 = vpop.f32.mrb[0].mxu0
      %v1480 = vpop.f32.mrb[0].mxu0
      %v1481 = vadd.f32 %v1385, %v1480
      %v1482 = vpop.f32.mrb[0].mxu0
      %1483 = vmatprep.mubr.bf16.mxu0 0
      %1484 = vmatmul.mubr.bf16.gmra.mrb[0].mxu0 %v1358
      %v1485 = vpop.f32.mrb[0].mxu0
      %v1486 = vadd.f32 %v1385, %v1485
      %v1487 = vpop.f32.mrb[0].mxu0
      %v1488 = vpop.f32.mrb[0].mxu0
      %v1489 = vadd.f32 %v1385, %v1488
      %v1490 = vpop.f32.mrb[0].mxu0
      %1491 = vmatprep.mubr.bf16.mxu0 0
      %1492 = vmatmul.mubr.bf16.gmra.mrb[0].mxu0 %v1359
      %v1493 = vpop.f32.mrb[0].mxu0
      %v1494 = vadd.f32 %v1385, %v1493
      %v1495 = vpop.f32.mrb[0].mxu0
      %v1496 = vpop.f32.mrb[0].mxu0
      %v1497 = vadd.f32 %v1385, %v1496
      %v1498 = vpop.f32.mrb[0].mxu0
      %1499 = vmatprep.mubr.bf16.mxu0 0
      %1500 = vmatmul.mubr.bf16.gmra.mrb[0].mxu0 %v1360
      %v1501 = vpop.f32.mrb[0].mxu0
      %v1502 = vadd.f32 %v1385, %v1501
      %v1503 = vpop.f32.mrb[0].mxu0
      %v1504 = vpop.f32.mrb[0].mxu0
      %v1505 = vadd.f32 %v1385, %v1504
      %v1506 = vpop.f32.mrb[0].mxu0
      %1507 = vmatprep.mubr.bf16.mxu0 0
      %1508 = vmatmul.mubr.bf16.gmra.mrb[0].mxu0 %v1361
      %v1509 = vpop.f32.mrb[0].mxu0
      %v1510 = vadd.f32 %v1385, %v1509
      %v1511 = vpop.f32.mrb[0].mxu0
      %v1512 = vpop.f32.mrb[0].mxu0
      %v1513 = vadd.f32 %v1385, %v1512
      %v1514 = vpop.f32.mrb[0].mxu0
      %1515 = vmatprep.mubr.bf16.mxu0 0
      %1516 = vmatmul.mubr.bf16.gmra.mrb[0].mxu0 %v1362
      %v1517 = vpop.f32.mrb[0].mxu0
      %v1518 = vadd.f32 %v1385, %v1517
      %v1519 = vpop.f32.mrb[0].mxu0
      %v1520 = vpop.f32.mrb[0].mxu0
      %v1521 = vadd.f32 %v1385, %v1520
      %v1522 = vpop.f32.mrb[0].mxu0
      %1523 = vmatprep.mubr.bf16.mxu0 0
      %1524 = vmatmul.mubr.bf16.gmra.mrb[0].mxu0 %v1363
      %v1525 = vpop.f32.mrb[0].mxu0
      %v1526 = vadd.f32 %v1385, %v1525
      %v1527 = vpop.f32.mrb[0].mxu0
      %v1528 = vpop.f32.mrb[0].mxu0
      %v1529 = vadd.f32 %v1385, %v1528
      %v1530 = vpop.f32.mrb[0].mxu0
      %1531 = vdwg.mxu0
      %1532 = vst [vmem:[#allocation15] sm:$0xff] %v1470
      %1533 = vst [vmem:[#allocation15 + $0x8] sm:$0xff] %v1473
      %1534 = vst [vmem:[#allocation15 + $0x10] sm:$0xff] %v1478
      %1535 = vst [vmem:[#allocation15 + $0x18] sm:$0xff] %v1481
      %1536 = vst [vmem:[#allocation15 + $0x20] sm:$0xff] %v1486
      %1537 = vst [vmem:[#allocation15 + $0x28] sm:$0xff] %v1489
      %1538 = vst [vmem:[#allocation15 + $0x30] sm:$0xff] %v1494
      %1539 = vst [vmem:[#allocation15 + $0x38] sm:$0xff] %v1497
      %1540 = vst [vmem:[#allocation15 + $0x40] sm:$0xff] %v1502
      %1541 = vst [vmem:[#allocation15 + $0x48] sm:$0xff] %v1505
      %1542 = vst [vmem:[#allocation15 + $0x50] sm:$0xff] %v1510
      %1543 = vst [vmem:[#allocation15 + $0x58] sm:$0xff] %v1513
      %1544 = vst [vmem:[#allocation15 + $0x60] sm:$0xff] %v1518
      %1545 = vst [vmem:[#allocation15 + $0x68] sm:$0xff] %v1521
      %1546 = vst [vmem:[#allocation15 + $0x70] sm:$0xff] %v1526
      %1547 = vst [vmem:[#allocation15 + $0x78] sm:$0xff] %v1529
    $region49: #{tpu_custom_call.1} parent=1 // pred_fallthru
      _
    // Predicated region
    $region50: #{tpu_custom_call.1} parent=1 // pred_check
      _
    $region51: #{tpu_custom_call.1} parent=1 // pred_check_branch
      %1549 = sbr.rel (0) target = $region53
    $region52: #{tpu_custom_call.1} parent=1 // pred_region
      %s1551 = ssub.s32 2048, 2048
      %1552 = vsyncadd [#allocation8], %s1551
      %s1553 = sshll.u32 [#allocation14], 4
      %s1554 = int_to_ptr.vmem [resolvable:$true] %s1553
      %1559 = dma.vmem_to_hbm [thread:$0]  %s1554, 2048, %s6, [#allocation8], 128, 128, 8
    $region53: #{tpu_custom_call.1} parent=1 // pred_fallthru
      _
    // Predicated region
    $region54: #{tpu_custom_call.1} parent=1 // pred_check
      _
    $region55: #{tpu_custom_call.1} parent=1 // pred_check_branch
      %1561 = sbr.rel (0) target = $region57
    $region56: #{tpu_custom_call.1} parent=1 // pred_region
      %s1563 = ssub.s32 2048, 2048
      %1564 = vsyncadd [#allocation16], %s1563
      %s1565 = sshll.u32 [#allocation15], 4
      %s1566 = int_to_ptr.vmem [resolvable:$true] %s1565
      %1571 = dma.vmem_to_hbm [thread:$0]  %s1566, 2048, %s7, [#allocation16], 128, 128, 8
    $region57: #{tpu_custom_call.1} parent=1 // pred_fallthru
      _
    // Predicated region
    $region58: #{tpu_custom_call.1} parent=1 // pred_check
      _
    $region59: #{tpu_custom_call.1} parent=1 // pred_check_branch
      %1573 = sbr.rel (0) target = $region61
    $region60: #{tpu_custom_call.1} parent=1 // pred_region
      %1574 = dma.done [#allocation8], 2048
    $region61: #{tpu_custom_call.1} parent=1 // pred_fallthru
      _
    // Predicated region
    $region62: #{tpu_custom_call.1} parent=1 // pred_check
      _
    $region63: #{tpu_custom_call.1} parent=1 // pred_check_branch
      %1576 = sbr.rel (0) target = $region65
    $region64: #{tpu_custom_call.1} parent=1 // pred_region
      %1577 = dma.done [#allocation16], 2048
    $region65: #{tpu_custom_call.1} parent=1 // pred_fallthru
      _
    %1578 = vsyncpa [#allocation7], 1
    %1579 = vsyncpa [#allocation10], 1
    %1580 = vsyncpa [#allocation13], 1
    %1581 = vsyncpa [#allocation8], 1
    %1582 = vsyncpa [#allocation16], 1

</llo_original>
